<compile_context>
chip_gen: v6e
topology: v6e:2x2x1
jax: 0.10.0
libtpu: 0.0.40
codegen_flags: <defaults>
</compile_context>

<pallas_src>
import functools

import jax
import jax.numpy as jnp
from jax import lax
from jax.experimental import pallas as pl
from jax.experimental.pallas import tpu as pltpu

# Tap time-offsets that ever need boundary masking (k=7 -> +/-3, k=3 -> +/-1).
_SHIFTS = (-3, -2, -1, 1, 2, 3)


def conv_encoder_kernel(x_ref, mask_ref, w1_ref, b1_ref, w2_ref, b2_ref,
                        w3_ref, b3_ref, w4_ref, b4_ref, out_ref, *,
                        compute_dtype):
    """One grid step: (Cpad, Nblk) activations, Nblk = batch_block * LT lanes."""
    Nblk = x_ref.shape[1]

    # Precomputed per-shift 0/1 validity masks, (6, Nblk): row for shift s zeroes
    # taps reading outside [0, L) of their own batch segment (covers both the
    # conv 'same' zero padding and roll wrap across merged batch segments).
    masks = mask_ref[...]

    def mrow(s):
        i = _SHIFTS.index(s)
        return masks[i:i + 1, :]

    # Weights arrive pre-cast to compute_dtype, constant block index -> DMA'd
    # once, VMEM-resident across grid steps.  Biases stay fp32.
    w1 = w1_ref[...]; b1 = b1_ref[...]
    w2 = w2_ref[...]; b2 = b2_ref[...]
    w3 = w3_ref[...]; b3 = b3_ref[...]
    w4 = w4_ref[...]; b4 = b4_ref[...]

    def conv(h, w, b, K, pad):
        # h: (Cin, Nblk) compute_dtype -> (Cout, Nblk) fp32 (bias added, no act).
        # Build the (K*Cin, Nblk) im2col matrix from lane-rolled (XLU slot) and
        # boundary-masked (one VPU multiply per tap) copies of h, then do ONE
        # MXU matmul with fp32 accumulation over the whole merged-batch N.
        taps = []
        for k in range(K):
            s = k - pad
            if s == 0:
                taps.append(h)
            else:
                shifted = pltpu.roll(h, shift=(-s) % Nblk, axis=1)
                taps.append(shifted * mrow(s))
        cols = taps[0] if K == 1 else jnp.concatenate(taps, axis=0)
        y = jnp.dot(w, cols, preferred_element_type=jnp.float32)
        return y + b

    # Cast upstream: taps/rolls/mask-multiplies run in compute_dtype (bf16 fast
    # path on v6e/v7x); bias add + tanh stay fp32.
    h = x_ref[...].astype(compute_dtype)                          # (Cpad, Nblk)
    a1 = jnp.tanh(conv(h, w1, b1, 7, 3)).astype(compute_dtype)    # (16, Nblk)
    a2 = jnp.tanh(conv(a1, w2, b2, 3, 1)).astype(compute_dtype)   # (32, Nblk)
    a3 = jnp.tanh(conv(a2, w3, b3, 3, 1)).astype(compute_dtype)   # (64, Nblk)
    y = conv(a3, w4, b4, 1, 0)                                    # (latent, Nblk)
    out_ref[...] = y.astype(out_ref.dtype)     # lane-dense (128-multiple) store


def _tensorcores_per_chip():
    """2 on dual-TensorCore chips (v4 / v5p / v7x), else 1 (v5e / v6e)."""
    try:
        kind = jax.devices()[0].device_kind.lower()
    except Exception:
        return 1
    return 2 if any(tag in kind for tag in ("v7", "v5p", "v4")) else 1


def _default_compute_dtype():
    """bf16 MXU inputs on v6e/v7x (fp32 accumulation), fp32 elsewhere."""
    try:
        kind = jax.devices()[0].device_kind.lower()
    except Exception:
        return jnp.float32
    return jnp.bfloat16 if ("v6" in kind or "v7" in kind) else jnp.float32


def _pick_batch_block(B, LT, cores, max_lanes=4096):
    """Generation-aware batch rows per grid step (Nblk = batch_block * LT lanes)."""
    divisors = [d for d in range(1, B + 1) if B % d == 0]
    fitting = [d for d in divisors if d * LT <= max_lanes] or [1]
    if cores >= 2:
        # Dual-TC: prefer the largest block giving an even number (>=2) of
        # parallel steps so both cores get balanced work.
        for d in sorted(fitting, reverse=True):
            steps = B // d
            if steps >= 2 and steps % 2 == 0:
                return d
        for d in sorted(fitting, reverse=True):
            if B // d >= 2:
                return d
    # Single-TC: the grid is a serial loop -> largest block (grid=1 if it fits).
    return max(fitting)


def conv_encoder(x_ncl, params, *, compute_dtype=None, batch_block=None):
    """x_ncl: (B, in_dim, L) float32, PyTorch NCL layout. Returns (B, latent_dim, L)."""
    (w1, b1), (w2, b2), (w3, b3), (w4, b4) = params   # w: (Cout, Cin, K), b: (Cout,)
    B, Cin, L = x_ncl.shape
    assert Cin == w1.shape[1]
    latent_dim = w4.shape[0]
    if compute_dtype is None:
        compute_dtype = _default_compute_dtype()
    compute_dtype = jnp.dtype(compute_dtype)

    # Lane-dense time dim (multiple of 128); channel dim padded to the sublane
    # packing of compute_dtype (8 for fp32, 16 for bf16) so im2col concat stays
    # tile-aligned.
    LT = max(128, ((L + 127) // 128) * 128)
    c_align = 8 * max(1, 4 // compute_dtype.itemsize)
    Cpad = max(c_align, ((Cin + c_align - 1) // c_align) * c_align)

    # (B, Cin, L) -> channels on sublanes, merged batch*time on lanes.
    x = jnp.transpose(x_ncl, (1, 0, 2))                            # (Cin, B, L)
    x = jnp.pad(x, ((0, Cpad - Cin), (0, 0), (0, LT - L)))         # (Cpad, B, LT)
    x = x.reshape(Cpad, B * LT)

    if Cpad != Cin:
        w1 = jnp.pad(w1, ((0, 0), (0, Cpad - Cin), (0, 0)))        # zero weight cols

    cores = _tensorcores_per_chip()
    if batch_block is None:
        batch_block = _pick_batch_block(B, LT, cores)
    assert B % batch_block == 0
    Nblk = batch_block * LT
    grid = (B // batch_block,)

    # Per-shift 0/1 validity masks, tiled per LT segment across the merged block.
    pos = jnp.arange(Nblk, dtype=jnp.int32) % LT
    mask_stack = jnp.stack(
        [((pos + s >= 0) & (pos + s < L)).astype(compute_dtype) for s in _SHIFTS],
        axis=0)                                                    # (6, Nblk)

    def flat(w):  # (Cout, Cin, K) -> (Cout, K*Cin), tap-major columns (im2col order)
        cout, cin, k = w.shape
        return jnp.transpose(w, (0, 2, 1)).reshape(cout, k * cin).astype(compute_dtype)

    ws = [flat(w1), flat(w2), flat(w3), flat(w4)]
    bs = [b.reshape(-1, 1).astype(jnp.float32) for b in (b1, b2, b3, b4)]

    def full(a):  # whole-array block, constant index -> DMA'd once, VMEM-resident
        return pl.BlockSpec(a.shape, lambda g: (0, 0))

    kernel = functools.partial(conv_encoder_kernel, compute_dtype=compute_dtype)

    out = pl.pallas_call(
        kernel,
        out_shape=jax.ShapeDtypeStruct((latent_dim, B * LT), jnp.float32),
        grid_spec=pltpu.PrefetchScalarGridSpec(
            num_scalar_prefetch=0,
            grid=grid,
            in_specs=[
                pl.BlockSpec((Cpad, Nblk), lambda g: (0, g)),
                full(mask_stack),
                full(ws[0]), full(bs[0]),
                full(ws[1]), full(bs[1]),
                full(ws[2]), full(bs[2]),
                full(ws[3]), full(bs[3]),
            ],
            out_specs=pl.BlockSpec((latent_dim, Nblk), lambda g: (0, g)),
        ),
        compiler_params=pltpu.CompilerParams(
            dimension_semantics=("parallel",)),
    )(x, mask_stack, ws[0], bs[0], ws[1], bs[1], ws[2], bs[2], ws[3], bs[3])

    out = out.reshape(latent_dim, B, LT)
    return jnp.transpose(out, (1, 0, 2))[:, :, :L]


def init_params(key, in_dim, latent_dim):
    """Deterministic synthetic parameters in PyTorch Conv1d layout (Cout, Cin, K)."""
    specs = [(16, in_dim, 7), (32, 16, 3), (64, 32, 3), (latent_dim, 64, 1)]
    params = []
    for i, (cout, cin, k) in enumerate(specs):
        kw, kb = jax.random.split(jax.random.fold_in(key, i))
        scale = 1.0 / (cin * k) ** 0.5
        w = jax.random.uniform(kw, (cout, cin, k), jnp.float32, -scale, scale)
        b = jax.random.uniform(kb, (cout,), jnp.float32, -scale, scale)
        params.append((w, b))
    return params


def reference(x_ncl, params):
    """Plain-JAX reference mirroring the PyTorch forward (NCL convs)."""
    pads = [3, 1, 1, 0]
    h = x_ncl
    for i, ((w, b), p) in enumerate(zip(params, pads)):
        h = lax.conv_general_dilated(h, w, window_strides=(1,), padding=[(p, p)],
                                     dimension_numbers=('NCH', 'OIH', 'NCH'))
        h = h + b.reshape(1, -1, 1)
        if i < 3:
            h = jnp.tanh(h)
    return h


if __name__ == "__main__":
    key = jax.random.PRNGKey(0)
    B, in_dim, L, latent_dim = 4, 4, 120, 8
    kx, kp = jax.random.split(key)
    x = jax.random.normal(kx, (B, in_dim, L), jnp.float32)
    params = init_params(kp, in_dim, latent_dim)

    y_ref = reference(x, params)

    # fp32 MXU inputs: strict correctness check.
    y32 = jax.block_until_ready(conv_encoder(x, params, compute_dtype=jnp.float32))
    assert y32.shape == (B, latent_dim, L), y32.shape
    err32 = float(jnp.max(jnp.abs(y32 - y_ref)))
    assert jnp.allclose(y32, y_ref, atol=1e-3, rtol=1e-3), err32

    # bf16 MXU inputs with fp32 accumulation (v6e/v7x fast path): loose check.
    ybf = jax.block_until_ready(conv_encoder(x, params, compute_dtype=jnp.bfloat16))
    errbf = float(jnp.max(jnp.abs(ybf - y_ref)))
    assert jnp.allclose(ybf, y_ref, atol=1e-1, rtol=1e-1), errbf

    print("KERNEL_OK")
</pallas_src>

<mosaic_0001>
module attributes {stable_mosaic.version = 11 : i64} {
  func.func @conv_encoder_kernel(%arg0: i32, %arg1: memref<8x512xf32, #tpu.memory_space<vmem>>, %arg2: memref<6x512xf32, #tpu.memory_space<vmem>>, %arg3: memref<16x56xf32, #tpu.memory_space<vmem>>, %arg4: memref<16x1xf32, #tpu.memory_space<vmem>>, %arg5: memref<32x48xf32, #tpu.memory_space<vmem>>, %arg6: memref<32x1xf32, #tpu.memory_space<vmem>>, %arg7: memref<64x96xf32, #tpu.memory_space<vmem>>, %arg8: memref<64x1xf32, #tpu.memory_space<vmem>>, %arg9: memref<8x64xf32, #tpu.memory_space<vmem>>, %arg10: memref<8x1xf32, #tpu.memory_space<vmem>>, %arg11: memref<8x512xf32, #tpu.memory_space<vmem>>) attributes {dimension_semantics = [#tpu.dimension_semantics<parallel>], iteration_bounds = array<i64: 1>, scalar_prefetch = 0 : i64, scratch_operands = 0 : i64, tpu.core_type = #tpu.core_type<tc>, window_params = [{transform_indices = @transform_0, window_bounds = array<i64: 8, 512>}, {pipeline_mode = #tpu.pipeline_mode<synchronous>, transform_indices = @transform_1, window_bounds = array<i64: 6, 512>}, {pipeline_mode = #tpu.pipeline_mode<synchronous>, transform_indices = @transform_2, window_bounds = array<i64: 16, 56>}, {pipeline_mode = #tpu.pipeline_mode<synchronous>, transform_indices = @transform_3, window_bounds = array<i64: 16, 1>}, {pipeline_mode = #tpu.pipeline_mode<synchronous>, transform_indices = @transform_4, window_bounds = array<i64: 32, 48>}, {pipeline_mode = #tpu.pipeline_mode<synchronous>, transform_indices = @transform_5, window_bounds = array<i64: 32, 1>}, {pipeline_mode = #tpu.pipeline_mode<synchronous>, transform_indices = @transform_6, window_bounds = array<i64: 64, 96>}, {pipeline_mode = #tpu.pipeline_mode<synchronous>, transform_indices = @transform_7, window_bounds = array<i64: 64, 1>}, {pipeline_mode = #tpu.pipeline_mode<synchronous>, transform_indices = @transform_8, window_bounds = array<i64: 8, 64>}, {pipeline_mode = #tpu.pipeline_mode<synchronous>, transform_indices = @transform_9, window_bounds = array<i64: 8, 1>}, {transform_indices = @transform_10, window_bounds = array<i64: 8, 512>}]} {
    %c0 = arith.constant 0 : index
    %c0_0 = arith.constant 0 : index
    %0 = vector.load %arg2[%c0, %c0_0] : memref<6x512xf32, #tpu.memory_space<vmem>>, vector<6x512xf32>
    %c0_1 = arith.constant 0 : index
    %c0_2 = arith.constant 0 : index
    %1 = vector.load %arg3[%c0_1, %c0_2] : memref<16x56xf32, #tpu.memory_space<vmem>>, vector<16x56xf32>
    %c0_3 = arith.constant 0 : index
    %c0_4 = arith.constant 0 : index
    %2 = vector.load %arg4[%c0_3, %c0_4] : memref<16x1xf32, #tpu.memory_space<vmem>>, vector<16x1xf32>
    %c0_5 = arith.constant 0 : index
    %c0_6 = arith.constant 0 : index
    %3 = vector.load %arg5[%c0_5, %c0_6] : memref<32x48xf32, #tpu.memory_space<vmem>>, vector<32x48xf32>
    %c0_7 = arith.constant 0 : index
    %c0_8 = arith.constant 0 : index
    %4 = vector.load %arg6[%c0_7, %c0_8] : memref<32x1xf32, #tpu.memory_space<vmem>>, vector<32x1xf32>
    %c0_9 = arith.constant 0 : index
    %c0_10 = arith.constant 0 : index
    %5 = vector.load %arg7[%c0_9, %c0_10] : memref<64x96xf32, #tpu.memory_space<vmem>>, vector<64x96xf32>
    %c0_11 = arith.constant 0 : index
    %c0_12 = arith.constant 0 : index
    %6 = vector.load %arg8[%c0_11, %c0_12] : memref<64x1xf32, #tpu.memory_space<vmem>>, vector<64x1xf32>
    %c0_13 = arith.constant 0 : index
    %c0_14 = arith.constant 0 : index
    %7 = vector.load %arg9[%c0_13, %c0_14] : memref<8x64xf32, #tpu.memory_space<vmem>>, vector<8x64xf32>
    %c0_15 = arith.constant 0 : index
    %c0_16 = arith.constant 0 : index
    %8 = vector.load %arg10[%c0_15, %c0_16] : memref<8x1xf32, #tpu.memory_space<vmem>>, vector<8x1xf32>
    %c0_17 = arith.constant 0 : index
    %c0_18 = arith.constant 0 : index
    %9 = vector.load %arg1[%c0_17, %c0_18] : memref<8x512xf32, #tpu.memory_space<vmem>>, vector<8x512xf32>
    %c3_i32 = arith.constant 3 : i32
    %10 = tpu.dynamic_rotate %9 by %c3_i32 dim 1 : vector<8x512xf32>, i32 -> vector<8x512xf32>
    %11 = vector.extract_strided_slice %0 {offsets = [0, 0], sizes = [1, 512], strides = [1, 1]} : vector<6x512xf32> to vector<1x512xf32>
    %12 = vector.broadcast %11 : vector<1x512xf32> to vector<8x512xf32>
    %13 = arith.mulf %10, %12 : vector<8x512xf32>
    %c2_i32 = arith.constant 2 : i32
    %14 = tpu.dynamic_rotate %9 by %c2_i32 dim 1 : vector<8x512xf32>, i32 -> vector<8x512xf32>
    %15 = vector.extract_strided_slice %0 {offsets = [1, 0], sizes = [1, 512], strides = [1, 1]} : vector<6x512xf32> to vector<1x512xf32>
    %16 = vector.broadcast %15 : vector<1x512xf32> to vector<8x512xf32>
    %17 = arith.mulf %14, %16 : vector<8x512xf32>
    %c1_i32 = arith.constant 1 : i32
    %18 = tpu.dynamic_rotate %9 by %c1_i32 dim 1 : vector<8x512xf32>, i32 -> vector<8x512xf32>
    %19 = vector.extract_strided_slice %0 {offsets = [2, 0], sizes = [1, 512], strides = [1, 1]} : vector<6x512xf32> to vector<1x512xf32>
    %20 = vector.broadcast %19 : vector<1x512xf32> to vector<8x512xf32>
    %21 = arith.mulf %18, %20 : vector<8x512xf32>
    %c511_i32 = arith.constant 511 : i32
    %22 = tpu.dynamic_rotate %9 by %c511_i32 dim 1 : vector<8x512xf32>, i32 -> vector<8x512xf32>
    %23 = vector.extract_strided_slice %0 {offsets = [3, 0], sizes = [1, 512], strides = [1, 1]} : vector<6x512xf32> to vector<1x512xf32>
    %24 = vector.broadcast %23 : vector<1x512xf32> to vector<8x512xf32>
    %25 = arith.mulf %22, %24 : vector<8x512xf32>
    %c510_i32 = arith.constant 510 : i32
    %26 = tpu.dynamic_rotate %9 by %c510_i32 dim 1 : vector<8x512xf32>, i32 -> vector<8x512xf32>
    %27 = vector.extract_strided_slice %0 {offsets = [4, 0], sizes = [1, 512], strides = [1, 1]} : vector<6x512xf32> to vector<1x512xf32>
    %28 = vector.broadcast %27 : vector<1x512xf32> to vector<8x512xf32>
    %29 = arith.mulf %26, %28 : vector<8x512xf32>
    %c509_i32 = arith.constant 509 : i32
    %30 = tpu.dynamic_rotate %9 by %c509_i32 dim 1 : vector<8x512xf32>, i32 -> vector<8x512xf32>
    %31 = vector.extract_strided_slice %0 {offsets = [5, 0], sizes = [1, 512], strides = [1, 1]} : vector<6x512xf32> to vector<1x512xf32>
    %32 = vector.broadcast %31 : vector<1x512xf32> to vector<8x512xf32>
    %33 = arith.mulf %30, %32 : vector<8x512xf32>
    %34 = tpu.concatenate %13, %17, %21, %9, %25, %29, %33 in 0 : vector<8x512xf32>, vector<8x512xf32>, vector<8x512xf32>, vector<8x512xf32>, vector<8x512xf32>, vector<8x512xf32>, vector<8x512xf32> -> vector<56x512xf32>
    %cst = arith.constant dense<0.000000e+00> : vector<16x512xf32>
    %35 = tpu.matmul %1, %34, %cst {dimension_numbers = #tpu.dot_dimension_numbers<[1], [0], [0], [1], [0, 0, 1, 1], [], []>} : vector<16x56xf32>, vector<56x512xf32>, vector<16x512xf32> -> vector<16x512xf32>
    %36 = vector.broadcast %2 : vector<16x1xf32> to vector<16x512xf32>
    %37 = arith.addf %35, %36 : vector<16x512xf32>
    %38 = math.tanh %37 : vector<16x512xf32>
    %c1_i32_19 = arith.constant 1 : i32
    %39 = tpu.dynamic_rotate %38 by %c1_i32_19 dim 1 : vector<16x512xf32>, i32 -> vector<16x512xf32>
    %40 = vector.extract_strided_slice %0 {offsets = [2, 0], sizes = [1, 512], strides = [1, 1]} : vector<6x512xf32> to vector<1x512xf32>
    %41 = vector.broadcast %40 : vector<1x512xf32> to vector<16x512xf32>
    %42 = arith.mulf %39, %41 : vector<16x512xf32>
    %c511_i32_20 = arith.constant 511 : i32
    %43 = tpu.dynamic_rotate %38 by %c511_i32_20 dim 1 : vector<16x512xf32>, i32 -> vector<16x512xf32>
    %44 = vector.extract_strided_slice %0 {offsets = [3, 0], sizes = [1, 512], strides = [1, 1]} : vector<6x512xf32> to vector<1x512xf32>
    %45 = vector.broadcast %44 : vector<1x512xf32> to vector<16x512xf32>
    %46 = arith.mulf %43, %45 : vector<16x512xf32>
    %47 = tpu.concatenate %42, %38, %46 in 0 : vector<16x512xf32>, vector<16x512xf32>, vector<16x512xf32> -> vector<48x512xf32>
    %cst_21 = arith.constant dense<0.000000e+00> : vector<32x512xf32>
    %48 = tpu.matmul %3, %47, %cst_21 {dimension_numbers = #tpu.dot_dimension_numbers<[1], [0], [0], [1], [0, 0, 1, 1], [], []>} : vector<32x48xf32>, vector<48x512xf32>, vector<32x512xf32> -> vector<32x512xf32>
    %49 = vector.broadcast %4 : vector<32x1xf32> to vector<32x512xf32>
    %50 = arith.addf %48, %49 : vector<32x512xf32>
    %51 = math.tanh %50 : vector<32x512xf32>
    %c1_i32_22 = arith.constant 1 : i32
    %52 = tpu.dynamic_rotate %51 by %c1_i32_22 dim 1 : vector<32x512xf32>, i32 -> vector<32x512xf32>
    %53 = vector.extract_strided_slice %0 {offsets = [2, 0], sizes = [1, 512], strides = [1, 1]} : vector<6x512xf32> to vector<1x512xf32>
    %54 = vector.broadcast %53 : vector<1x512xf32> to vector<32x512xf32>
    %55 = arith.mulf %52, %54 : vector<32x512xf32>
    %c511_i32_23 = arith.constant 511 : i32
    %56 = tpu.dynamic_rotate %51 by %c511_i32_23 dim 1 : vector<32x512xf32>, i32 -> vector<32x512xf32>
    %57 = vector.extract_strided_slice %0 {offsets = [3, 0], sizes = [1, 512], strides = [1, 1]} : vector<6x512xf32> to vector<1x512xf32>
    %58 = vector.broadcast %57 : vector<1x512xf32> to vector<32x512xf32>
    %59 = arith.mulf %56, %58 : vector<32x512xf32>
    %60 = tpu.concatenate %55, %51, %59 in 0 : vector<32x512xf32>, vector<32x512xf32>, vector<32x512xf32> -> vector<96x512xf32>
    %cst_24 = arith.constant dense<0.000000e+00> : vector<64x512xf32>
    %61 = tpu.matmul %5, %60, %cst_24 {dimension_numbers = #tpu.dot_dimension_numbers<[1], [0], [0], [1], [0, 0, 1, 1], [], []>} : vector<64x96xf32>, vector<96x512xf32>, vector<64x512xf32> -> vector<64x512xf32>
    %62 = vector.broadcast %6 : vector<64x1xf32> to vector<64x512xf32>
    %63 = arith.addf %61, %62 : vector<64x512xf32>
    %64 = math.tanh %63 : vector<64x512xf32>
    %cst_25 = arith.constant dense<0.000000e+00> : vector<8x512xf32>
    %65 = tpu.matmul %7, %64, %cst_25 {dimension_numbers = #tpu.dot_dimension_numbers<[1], [0], [0], [1], [0, 0, 1, 1], [], []>} : vector<8x64xf32>, vector<64x512xf32>, vector<8x512xf32> -> vector<8x512xf32>
    %66 = vector.broadcast %8 : vector<8x1xf32> to vector<8x512xf32>
    %67 = arith.addf %65, %66 : vector<8x512xf32>
    %c0_26 = arith.constant 0 : index
    %c0_27 = arith.constant 0 : index
    %68 = vector.load %arg11[%c0_26, %c0_27] : memref<8x512xf32, #tpu.memory_space<vmem>>, vector<8x512xf32>
    tpu.vector_store %arg11[%c0_26, %c0_27], %67 {strides = array<i32>} : memref<8x512xf32, #tpu.memory_space<vmem>>, vector<8x512xf32>,
    return
  }
  func.func @transform_0(%arg0: i32) -> (i32, i32) {
    %c0_i32 = arith.constant 0 : i32
    %c0_i32_0 = arith.constant 0 : i32
    return %c0_i32, %arg0 : i32, i32
  }
  func.func @transform_1(%arg0: i32) -> (i32, i32) {
    %c0_i32 = arith.constant 0 : i32
    %c0_i32_0 = arith.constant 0 : i32
    %c0_i32_1 = arith.constant 0 : i32
    return %c0_i32, %c0_i32_0 : i32, i32
  }
  func.func @transform_2(%arg0: i32) -> (i32, i32) {
    %c0_i32 = arith.constant 0 : i32
    %c0_i32_0 = arith.constant 0 : i32
    %c0_i32_1 = arith.constant 0 : i32
    return %c0_i32, %c0_i32_0 : i32, i32
  }
  func.func @transform_3(%arg0: i32) -> (i32, i32) {
    %c0_i32 = arith.constant 0 : i32
    %c0_i32_0 = arith.constant 0 : i32
    %c0_i32_1 = arith.constant 0 : i32
    return %c0_i32, %c0_i32_0 : i32, i32
  }
  func.func @transform_4(%arg0: i32) -> (i32, i32) {
    %c0_i32 = arith.constant 0 : i32
    %c0_i32_0 = arith.constant 0 : i32
    %c0_i32_1 = arith.constant 0 : i32
    return %c0_i32, %c0_i32_0 : i32, i32
  }
  func.func @transform_5(%arg0: i32) -> (i32, i32) {
    %c0_i32 = arith.constant 0 : i32
    %c0_i32_0 = arith.constant 0 : i32
    %c0_i32_1 = arith.constant 0 : i32
    return %c0_i32, %c0_i32_0 : i32, i32
  }
  func.func @transform_6(%arg0: i32) -> (i32, i32) {
    %c0_i32 = arith.constant 0 : i32
    %c0_i32_0 = arith.constant 0 : i32
    %c0_i32_1 = arith.constant 0 : i32
    return %c0_i32, %c0_i32_0 : i32, i32
  }
  func.func @transform_7(%arg0: i32) -> (i32, i32) {
    %c0_i32 = arith.constant 0 : i32
    %c0_i32_0 = arith.constant 0 : i32
    %c0_i32_1 = arith.constant 0 : i32
    return %c0_i32, %c0_i32_0 : i32, i32
  }
  func.func @transform_8(%arg0: i32) -> (i32, i32) {
    %c0_i32 = arith.constant 0 : i32
    %c0_i32_0 = arith.constant 0 : i32
    %c0_i32_1 = arith.constant 0 : i32
    return %c0_i32, %c0_i32_0 : i32, i32
  }
  func.func @transform_9(%arg0: i32) -> (i32, i32) {
    %c0_i32 = arith.constant 0 : i32
    %c0_i32_0 = arith.constant 0 : i32
    %c0_i32_1 = arith.constant 0 : i32
    return %c0_i32, %c0_i32_0 : i32, i32
  }
  func.func @transform_10(%arg0: i32) -> (i32, i32) {
    %c0_i32 = arith.constant 0 : i32
    %c0_i32_0 = arith.constant 0 : i32
    return %c0_i32, %arg0 : i32, i32
  }
}

</mosaic_0001>

<llo_original>
// kernel: tpu_custom_call.1
$region0: #{tpu_custom_call.1}
  #allocation0 [shape = 'u32[]', space=smem, size = 0x4, offset = 0x4, fixed_abs, tag = 'smem constant byte address 0x4 - core index']
  #allocation1 [shape = 'u32[144,128]{1,0:T(1,128)}', space=vmem, size = 0x12000, scoped, tag = 'internal scratch']
  %s0 = inlined_call_operand.vmem [shape: f32[8,512], index: 0, kind: input, shape index: {}]
  %s1 = inlined_call_operand.hbm [shape: f32[6,512], index: 1, kind: input, shape index: {}]
  %s2 = inlined_call_operand.hbm [shape: f32[16,56], index: 2, kind: input, shape index: {}]
  %s3 = inlined_call_operand.vmem [shape: f32[16,1], index: 3, kind: input, shape index: {}]
  %s4 = inlined_call_operand.vmem [shape: f32[32,48], index: 4, kind: input, shape index: {}]
  %s5 = inlined_call_operand.vmem [shape: f32[32,1], index: 5, kind: input, shape index: {}]
  %s6 = inlined_call_operand.vmem [shape: f32[64,96], index: 6, kind: input, shape index: {}]
  %s7 = inlined_call_operand.vmem [shape: f32[64,1], index: 7, kind: input, shape index: {}]
  %s8 = inlined_call_operand.vmem [shape: f32[8,64], index: 8, kind: input, shape index: {}]
  %s9 = inlined_call_operand.vmem [shape: f32[8,1], index: 9, kind: input, shape index: {}]
  %s10 = inlined_call_operand.hbm [shape: f32[8,512], index: 10, kind: output, shape index: {}]
  %s11 = sld [smem:[#allocation0]]
  $region58: #{tpu_custom_call.1} parent=0
    _
  %s13 = ssub.s32 1, %s11
  %s14 = scalar_select 0, %s13, %s11
  $region1: #{tpu_custom_call.1} parent=0
    #allocation2 [shape = 'u8[16384]{0}', space=vmem, size = 0x4000, scoped, tag = 'input window, operand 1, single buffered']
    #allocation3 [shape = 's32[1]{0}', space=sflag, size = 0x4, scoped, tag = 'scoped memory for tpu_custom_call.1']
    #allocation4 [shape = 's32[1]{0}', space=sflag, size = 0x4, scoped, tag = 'scoped memory for tpu_custom_call.1']
    #allocation5 [shape = 'u8[8192]{0}', space=vmem, size = 0x2000, scoped, tag = 'input window, operand 2, single buffered']
    #allocation6 [shape = 's32[1]{0}', space=sflag, size = 0x4, scoped, tag = 'scoped memory for tpu_custom_call.1']
    #allocation7 [shape = 'u8[16384]{0}', space=vmem, size = 0x4000, scoped, tag = 'output window, operand 0, single buffered']
    %15 = vsyncpa [#allocation3], 0
    %16 = vsyncpa [#allocation6], 0
    %17 = vsyncpa [#allocation4], 0
    // Predicated region
    $region2: #{tpu_custom_call.1} parent=1 // pred_check
      _
    $region3: #{tpu_custom_call.1} parent=1 // pred_check_branch
      %19 = sbr.rel (0) target = $region5
    $region4: #{tpu_custom_call.1} parent=1 // pred_region
      _
    $region5: #{tpu_custom_call.1} parent=1 // pred_fallthru
      _
    // Predicated region
    $region6: #{tpu_custom_call.1} parent=1 // pred_check
      _
    $region7: #{tpu_custom_call.1} parent=1 // pred_check_branch
      %21 = sbr.rel (0) target = $region9
    $region8: #{tpu_custom_call.1} parent=1 // pred_region
      %s23 = ssub.s32 512, 512
      %24 = vsyncadd [#allocation3], %s23
      %s26 = sshll.u32 [#allocation2], 4
      %s27 = int_to_ptr.vmem [resolvable:$true] %s26
      %29 = dma.hbm_to_vmem [thread:$0]  %s1, 512, %s27, [#allocation3]
    $region9: #{tpu_custom_call.1} parent=1 // pred_fallthru
      _
    // Predicated region
    $region10: #{tpu_custom_call.1} parent=1 // pred_check
      _
    $region11: #{tpu_custom_call.1} parent=1 // pred_check_branch
      %31 = sbr.rel (0) target = $region13
    $region12: #{tpu_custom_call.1} parent=1 // pred_region
      %s33 = ssub.s32 256, 256
      %34 = vsyncadd [#allocation6], %s33
      %s35 = sshll.u32 [#allocation5], 4
      %s36 = int_to_ptr.vmem [resolvable:$true] %s35
      %41 = dma.hbm_to_vmem [thread:$0]  %s2, 256, %s36, [#allocation6], 128, 128, 8
    $region13: #{tpu_custom_call.1} parent=1 // pred_fallthru
      _
    // Predicated region
    $region14: #{tpu_custom_call.1} parent=1 // pred_check
      _
    $region15: #{tpu_custom_call.1} parent=1 // pred_check_branch
      %43 = sbr.rel (0) target = $region17
    $region16: #{tpu_custom_call.1} parent=1 // pred_region
      _
    $region17: #{tpu_custom_call.1} parent=1 // pred_fallthru
      _
    // Predicated region
    $region18: #{tpu_custom_call.1} parent=1 // pred_check
      _
    $region19: #{tpu_custom_call.1} parent=1 // pred_check_branch
      %45 = sbr.rel (0) target = $region21
    $region20: #{tpu_custom_call.1} parent=1 // pred_region
      _
    $region21: #{tpu_custom_call.1} parent=1 // pred_fallthru
      _
    // Predicated region
    $region22: #{tpu_custom_call.1} parent=1 // pred_check
      _
    $region23: #{tpu_custom_call.1} parent=1 // pred_check_branch
      %47 = sbr.rel (0) target = $region25
    $region24: #{tpu_custom_call.1} parent=1 // pred_region
      _
    $region25: #{tpu_custom_call.1} parent=1 // pred_fallthru
      _
    // Predicated region
    $region26: #{tpu_custom_call.1} parent=1 // pred_check
      _
    $region27: #{tpu_custom_call.1} parent=1 // pred_check_branch
      %49 = sbr.rel (0) target = $region29
    $region28: #{tpu_custom_call.1} parent=1 // pred_region
      _
    $region29: #{tpu_custom_call.1} parent=1 // pred_fallthru
      _
    // Predicated region
    $region30: #{tpu_custom_call.1} parent=1 // pred_check
      _
    $region31: #{tpu_custom_call.1} parent=1 // pred_check_branch
      %51 = sbr.rel (0) target = $region33
    $region32: #{tpu_custom_call.1} parent=1 // pred_region
      _
    $region33: #{tpu_custom_call.1} parent=1 // pred_fallthru
      _
    // Predicated region
    $region34: #{tpu_custom_call.1} parent=1 // pred_check
      _
    $region35: #{tpu_custom_call.1} parent=1 // pred_check_branch
      %53 = sbr.rel (0) target = $region37
    $region36: #{tpu_custom_call.1} parent=1 // pred_region
      _
    $region37: #{tpu_custom_call.1} parent=1 // pred_fallthru
      _
    // Predicated region
    $region38: #{tpu_custom_call.1} parent=1 // pred_check
      _
    $region39: #{tpu_custom_call.1} parent=1 // pred_check_branch
      %55 = sbr.rel (0) target = $region41
    $region40: #{tpu_custom_call.1} parent=1 // pred_region
      _
    $region41: #{tpu_custom_call.1} parent=1 // pred_fallthru
      _
    // Predicated region
    $region42: #{tpu_custom_call.1} parent=1 // pred_check
      _
    $region43: #{tpu_custom_call.1} parent=1 // pred_check_branch
      %57 = sbr.rel (0) target = $region45
    $region44: #{tpu_custom_call.1} parent=1 // pred_region
      %58 = dma.done [#allocation3], 512
    $region45: #{tpu_custom_call.1} parent=1 // pred_fallthru
      _
    // Predicated region
    $region46: #{tpu_custom_call.1} parent=1 // pred_check
      _
    $region47: #{tpu_custom_call.1} parent=1 // pred_check_branch
      %60 = sbr.rel (0) target = $region49
    $region48: #{tpu_custom_call.1} parent=1 // pred_region
      %61 = dma.done [#allocation6], 256
    $region49: #{tpu_custom_call.1} parent=1 // pred_fallthru
      _
    %v62 = vld [vmem:[#allocation2] sm:$0x3f]
    %v63 = vld [vmem:[#allocation2 + $0x8] sm:$0x3f]
    %v64 = vld [vmem:[#allocation2 + $0x10] sm:$0x3f]
    %v65 = vld [vmem:[#allocation2 + $0x18] sm:$0x3f]
    %v66 = vld [vmem:[#allocation5] sm:$0xff]
    %v67 = vld [vmem:[#allocation5 + $0x8] sm:$0xff]
    %v68 = vld [vmem:[%s3] sm:$0xff]
    %v69 = vld [vmem:[%s3 + $0x8] sm:$0xff]
    %v70 = vld [vmem:[%s4] sm:$0xff]
    %v71 = vld [vmem:[%s4 + $0x8] sm:$0xff]
    %v72 = vld [vmem:[%s4 + $0x10] sm:$0xff]
    %v73 = vld [vmem:[%s4 + $0x18] sm:$0xff]
    %v74 = vld [vmem:[%s5] sm:$0xff]
    %v75 = vld [vmem:[%s5 + $0x8] sm:$0xff]
    %v76 = vld [vmem:[%s5 + $0x10] sm:$0xff]
    %v77 = vld [vmem:[%s5 + $0x18] sm:$0xff]
    %v78 = vld [vmem:[%s6] sm:$0xff]
    %v79 = vld [vmem:[%s6 + $0x8] sm:$0xff]
    %v80 = vld [vmem:[%s6 + $0x10] sm:$0xff]
    %v81 = vld [vmem:[%s6 + $0x18] sm:$0xff]
    %v82 = vld [vmem:[%s6 + $0x20] sm:$0xff]
    %v83 = vld [vmem:[%s6 + $0x28] sm:$0xff]
    %v84 = vld [vmem:[%s6 + $0x30] sm:$0xff]
    %v85 = vld [vmem:[%s6 + $0x38] sm:$0xff]
    %v86 = vld [vmem:[%s7] sm:$0xff]
    %v87 = vld [vmem:[%s7 + $0x8] sm:$0xff]
    %v88 = vld [vmem:[%s7 + $0x10] sm:$0xff]
    %v89 = vld [vmem:[%s7 + $0x18] sm:$0xff]
    %v90 = vld [vmem:[%s7 + $0x20] sm:$0xff]
    %v91 = vld [vmem:[%s7 + $0x28] sm:$0xff]
    %v92 = vld [vmem:[%s7 + $0x30] sm:$0xff]
    %v93 = vld [vmem:[%s7 + $0x38] sm:$0xff]
    %v94 = vld [vmem:[%s8] sm:$0xff]
    %v95 = vld [vmem:[%s9] sm:$0xff]
    %v96 = vld [vmem:[%s0] sm:$0xff]
    %v97 = vld [vmem:[%s0 + $0x8] sm:$0xff]
    %v98 = vld [vmem:[%s0 + $0x10] sm:$0xff]
    %v99 = vld [vmem:[%s0 + $0x18] sm:$0xff]
    %100 = vrot.lane.b32.xlu0 %v96, 3
    %v101 = vpop.permute.xlu0 %100
    %102 = vrot.lane.b32.xlu0 %v97, 3
    %v103 = vpop.permute.xlu0 %102
    %104 = vrot.lane.b32.xlu0 %v98, 3
    %v105 = vpop.permute.xlu0 %104
    %106 = vrot.lane.b32.xlu0 %v99, 3
    %v107 = vpop.permute.xlu0 %106
    %v108 = vlaneseq
    %v109 = vand.u32 %v108, 127
    %vm110 = vcmp.lt.s32.totalorder %v109, 3
    %v111 = vsel %vm110, %v105, %v107
    %v112 = vsel %vm110, %v103, %v105
    %v113 = vsel %vm110, %v101, %v103
    %v114 = vsel %vm110, %v107, %v101
    %v115 = vlaneseq
    %v116 = vshrl.u32 %v115, 7
    %v117 = vsub.s32 0, %v116
    %v118 = vrot.slane %v62, %v117
    %v119 = vlaneseq
    %v120 = vshrl.u32 %v119, 7
    %v121 = vsub.s32 0, %v120
    %v122 = vrot.slane %v63, %v121
    %v123 = vlaneseq
    %v124 = vshrl.u32 %v123, 7
    %v125 = vsub.s32 0, %v124
    %v126 = vrot.slane %v64, %v125
    %v127 = vlaneseq
    %v128 = vshrl.u32 %v127, 7
    %v129 = vsub.s32 0, %v128
    %v130 = vrot.slane %v65, %v129
    %v131 = vmul.f32 %v114, %v118
    %v132 = vmul.f32 %v113, %v122
    %v133 = vmul.f32 %v112, %v126
    %v134 = vmul.f32 %v111, %v130
    %135 = vrot.lane.b32.xlu0 %v96, 2
    %v136 = vpop.permute.xlu0 %135
    %137 = vrot.lane.b32.xlu0 %v97, 2
    %v138 = vpop.permute.xlu0 %137
    %139 = vrot.lane.b32.xlu0 %v98, 2
    %v140 = vpop.permute.xlu0 %139
    %141 = vrot.lane.b32.xlu0 %v99, 2
    %v142 = vpop.permute.xlu0 %141
    %vm143 = vcmp.lt.s32.totalorder %v109, 2
    %v144 = vsel %vm143, %v140, %v142
    %v145 = vsel %vm143, %v138, %v140
    %v146 = vsel %vm143, %v136, %v138
    %v147 = vsel %vm143, %v142, %v136
    %v148 = vlaneseq
    %v149 = vshrl.u32 %v148, 7
    %v150 = vsub.s32 1, %v149
    %v151 = vrot.slane %v62, %v150
    %v152 = vlaneseq
    %v153 = vshrl.u32 %v152, 7
    %v154 = vsub.s32 1, %v153
    %v155 = vrot.slane %v63, %v154
    %v156 = vlaneseq
    %v157 = vshrl.u32 %v156, 7
    %v158 = vsub.s32 1, %v157
    %v159 = vrot.slane %v64, %v158
    %v160 = vlaneseq
    %v161 = vshrl.u32 %v160, 7
    %v162 = vsub.s32 1, %v161
    %v163 = vrot.slane %v65, %v162
    %v164 = vmul.f32 %v147, %v151
    %v165 = vmul.f32 %v146, %v155
    %v166 = vmul.f32 %v145, %v159
    %v167 = vmul.f32 %v144, %v163
    %168 = vrot.lane.b32.xlu0 %v96, 1
    %v169 = vpop.permute.xlu0 %168
    %170 = vrot.lane.b32.xlu0 %v97, 1
    %v171 = vpop.permute.xlu0 %170
    %172 = vrot.lane.b32.xlu0 %v98, 1
    %v173 = vpop.permute.xlu0 %172
    %174 = vrot.lane.b32.xlu0 %v99, 1
    %v175 = vpop.permute.xlu0 %174
    %vm176 = vcmp.lt.s32.totalorder %v109, 1
    %v177 = vsel %vm176, %v173, %v175
    %v178 = vsel %vm176, %v171, %v173
    %v179 = vsel %vm176, %v169, %v171
    %v180 = vsel %vm176, %v175, %v169
    %v181 = vlaneseq
    %v182 = vshrl.u32 %v181, 7
    %v183 = vsub.s32 2, %v182
    %v184 = vrot.slane %v62, %v183
    %v185 = vlaneseq
    %v186 = vshrl.u32 %v185, 7
    %v187 = vsub.s32 2, %v186
    %v188 = vrot.slane %v63, %v187
    %v189 = vlaneseq
    %v190 = vshrl.u32 %v189, 7
    %v191 = vsub.s32 2, %v190
    %v192 = vrot.slane %v64, %v191
    %v193 = vlaneseq
    %v194 = vshrl.u32 %v193, 7
    %v195 = vsub.s32 2, %v194
    %v196 = vrot.slane %v65, %v195
    %v197 = vmul.f32 %v180, %v184
    %v198 = vmul.f32 %v179, %v188
    %v199 = vmul.f32 %v178, %v192
    %v200 = vmul.f32 %v177, %v196
    %201 = vrot.lane.b32.xlu0 %v96, 127
    %v202 = vpop.permute.xlu0 %201
    %203 = vrot.lane.b32.xlu0 %v97, 127
    %v204 = vpop.permute.xlu0 %203
    %205 = vrot.lane.b32.xlu0 %v98, 127
    %v206 = vpop.permute.xlu0 %205
    %207 = vrot.lane.b32.xlu0 %v99, 127
    %v208 = vpop.permute.xlu0 %207
    %vm209 = vcmp.lt.s32.totalorder %v109, 127
    %v210 = vsel %vm209, %v206, %v208
    %v211 = vsel %vm209, %v204, %v206
    %v212 = vsel %vm209, %v202, %v204
    %v213 = vsel %vm209, %v208, %v202
    %v214 = vlaneseq
    %v215 = vshrl.u32 %v214, 7
    %v216 = vsub.s32 3, %v215
    %v217 = vrot.slane %v62, %v216
    %v218 = vlaneseq
    %v219 = vshrl.u32 %v218, 7
    %v220 = vsub.s32 3, %v219
    %v221 = vrot.slane %v63, %v220
    %v222 = vlaneseq
    %v223 = vshrl.u32 %v222, 7
    %v224 = vsub.s32 3, %v223
    %v225 = vrot.slane %v64, %v224
    %v226 = vlaneseq
    %v227 = vshrl.u32 %v226, 7
    %v228 = vsub.s32 3, %v227
    %v229 = vrot.slane %v65, %v228
    %v230 = vmul.f32 %v212, %v217
    %v231 = vmul.f32 %v211, %v221
    %v232 = vmul.f32 %v210, %v225
    %v233 = vmul.f32 %v213, %v229
    %234 = vrot.lane.b32.xlu0 %v96, 126
    %v235 = vpop.permute.xlu0 %234
    %236 = vrot.lane.b32.xlu0 %v97, 126
    %v237 = vpop.permute.xlu0 %236
    %238 = vrot.lane.b32.xlu0 %v98, 126
    %v239 = vpop.permute.xlu0 %238
    %240 = vrot.lane.b32.xlu0 %v99, 126
    %v241 = vpop.permute.xlu0 %240
    %vm242 = vcmp.lt.s32.totalorder %v109, 126
    %v243 = vsel %vm242, %v239, %v241
    %v244 = vsel %vm242, %v237, %v239
    %v245 = vsel %vm242, %v235, %v237
    %v246 = vsel %vm242, %v241, %v235
    %v247 = vlaneseq
    %v248 = vshrl.u32 %v247, 7
    %v249 = vsub.s32 4, %v248
    %v250 = vrot.slane %v62, %v249
    %v251 = vlaneseq
    %v252 = vshrl.u32 %v251, 7
    %v253 = vsub.s32 4, %v252
    %v254 = vrot.slane %v63, %v253
    %v255 = vlaneseq
    %v256 = vshrl.u32 %v255, 7
    %v257 = vsub.s32 4, %v256
    %v258 = vrot.slane %v64, %v257
    %v259 = vlaneseq
    %v260 = vshrl.u32 %v259, 7
    %v261 = vsub.s32 4, %v260
    %v262 = vrot.slane %v65, %v261
    %v263 = vmul.f32 %v245, %v250
    %v264 = vmul.f32 %v244, %v254
    %v265 = vmul.f32 %v243, %v258
    %v266 = vmul.f32 %v246, %v262
    %267 = vrot.lane.b32.xlu0 %v96, 125
    %v268 = vpop.permute.xlu0 %267
    %269 = vrot.lane.b32.xlu0 %v97, 125
    %v270 = vpop.permute.xlu0 %269
    %271 = vrot.lane.b32.xlu0 %v98, 125
    %v272 = vpop.permute.xlu0 %271
    %273 = vrot.lane.b32.xlu0 %v99, 125
    %v274 = vpop.permute.xlu0 %273
    %vm275 = vcmp.lt.s32.totalorder %v109, 125
    %v276 = vsel %vm275, %v272, %v274
    %v277 = vsel %vm275, %v270, %v272
    %v278 = vsel %vm275, %v268, %v270
    %v279 = vsel %vm275, %v274, %v268
    %v280 = vlaneseq
    %v281 = vshrl.u32 %v280, 7
    %v282 = vsub.s32 5, %v281
    %v283 = vrot.slane %v62, %v282
    %v284 = vlaneseq
    %v285 = vshrl.u32 %v284, 7
    %v286 = vsub.s32 5, %v285
    %v287 = vrot.slane %v63, %v286
    %v288 = vlaneseq
    %v289 = vshrl.u32 %v288, 7
    %v290 = vsub.s32 5, %v289
    %v291 = vrot.slane %v64, %v290
    %v292 = vlaneseq
    %v293 = vshrl.u32 %v292, 7
    %v294 = vsub.s32 5, %v293
    %v295 = vrot.slane %v65, %v294
    %v296 = vmul.f32 %v278, %v283
    %v297 = vmul.f32 %v277, %v287
    %v298 = vmul.f32 %v276, %v291
    %v299 = vmul.f32 %v279, %v295
    %301 = vset.pattern.permute.xlu0 0
    %302 = vperm.xlu0 %301, %v68
    %v303 = vpop.permute.xlu0 %302
    %306 = vset.pattern.permute.xlu0 0
    %307 = vperm.xlu0 %306, %v69
    %v308 = vpop.permute.xlu0 %307
    %vm310 = vcmask 457728
    %v312 = vsel %vm310, %v66, 0
    %v315 = vsel %vm310, %v67, 0
    %317 = vmatprep.subr.mxu0 0.0
    %318 = vmatpush1.msra.mxu0 0.0
    %319 = vmatprep.subr.mxu0 0.0
    %320 = vmatpush1.msra.mxu0 0.0
    %321 = vmatprep.subr.mxu0 0.0
    %322 = vmatpush1.msra.mxu0 0.0
    %323 = vmatprep.subr.mxu0 0.0
    %324 = vmatpush1.msra.mxu0 0.0
    %325 = vmatprep.subr.mxu0 0.0
    %326 = vmatpush1.msra.mxu0 0.0
    %327 = vmatprep.subr.mxu0 0.0
    %328 = vmatpush1.msra.mxu0 0.0
    %329 = vmatprep.subr.mxu0 0.0
    %330 = vmatpush1.msra.mxu0 0.0
    %331 = vmatprep.subr.mxu0 0.0
    %332 = vmatpush1.msra.mxu0 0.0
    %333 = vmatprep.subr.mxu0 0.0
    %334 = vmatpush1.msra.mxu0 0.0
    %335 = vmatprep.subr.mxu0 %v297
    %336 = vmatpush1.msra.mxu0 %v296
    %337 = vmatprep.subr.mxu0 %v264
    %338 = vmatpush1.msra.mxu0 %v263
    %339 = vmatprep.subr.mxu0 %v231
    %340 = vmatpush1.msra.mxu0 %v230
    %341 = vmatprep.subr.mxu0 %v97
    %342 = vmatpush1.msra.mxu0 %v96
    %343 = vmatprep.subr.mxu0 %v198
    %344 = vmatpush1.msra.mxu0 %v197
    %345 = vmatprep.subr.mxu0 %v165
    %346 = vmatpush1.msra.mxu0 %v164
    %347 = vmatprep.subr.mxu0 %v132
    %348 = vmatpush1.msra.mxu0 %v131
    %349 = vmatprep.subr.mxu0 0.0
    %350 = vmatpush2.msra.mxu0 0.0
    %351 = vmatprep.subr.mxu0 0.0
    %352 = vmatpush2.msra.mxu0 0.0
    %353 = vmatprep.subr.mxu0 0.0
    %354 = vmatpush2.msra.mxu0 0.0
    %355 = vmatprep.subr.mxu0 0.0
    %356 = vmatpush2.msra.mxu0 0.0
    %357 = vmatprep.subr.mxu0 0.0
    %358 = vmatpush2.msra.mxu0 0.0
    %359 = vmatprep.subr.mxu0 0.0
    %360 = vmatpush2.msra.mxu0 0.0
    %361 = vmatprep.subr.mxu0 0.0
    %362 = vmatpush2.msra.mxu0 0.0
    %363 = vmatprep.subr.mxu0 0.0
    %364 = vmatpush2.msra.mxu0 0.0
    %365 = vmatprep.subr.mxu0 0.0
    %366 = vmatpush2.msra.mxu0 0.0
    %367 = vmatprep.subr.mxu0 0.0
    %368 = vmatpush2.msra.mxu0 0.0
    %369 = vmatprep.subr.mxu0 0.0
    %370 = vmatpush2.msra.mxu0 0.0
    %371 = vmatprep.subr.mxu0 0.0
    %372 = vmatpush2.msra.mxu0 0.0
    %373 = vmatprep.subr.mxu0 0.0
    %374 = vmatpush2.msra.mxu0 0.0
    %375 = vmatprep.subr.mxu0 0.0
    %376 = vmatpush2.msra.mxu0 0.0
    %377 = vmatprep.subr.mxu0 0.0
    %378 = vmatpush2.msra.mxu0 0.0
    %379 = vmatprep.subr.mxu0 0.0
    %380 = vmatpush2.msra.mxu0 0.0
    %381 = vmatprep.mubr.f32.mxu0 0.0
    %382 = vmatmul.mubr.f32.gmra.mxu0 %v312
    %v383 = vpop.f32.mrf.mxu0
    %v384 = vadd.f32 %v303, %v383
    %v385 = vpop.f32.mrf.mxu0
    %v386 = vadd.f32 %v303, %v385
    %387 = vmatprep.mubr.f32.mxu0 0.0
    %388 = vmatmul.mubr.f32.gmra.mxu0 %v315
    %v389 = vpop.f32.mrf.mxu0
    %v390 = vadd.f32 %v308, %v389
    %v391 = vpop.f32.mrf.mxu0
    %v392 = vadd.f32 %v308, %v391
    %393 = vdwg.mxu0
    %394 = vmatprep.subr.mxu0 0.0
    %395 = vmatpush1.msra.mxu0 0.0
    %396 = vmatprep.subr.mxu0 0.0
    %397 = vmatpush1.msra.mxu0 0.0
    %398 = vmatprep.subr.mxu0 0.0
    %399 = vmatpush1.msra.mxu0 0.0
    %400 = vmatprep.subr.mxu0 0.0
    %401 = vmatpush1.msra.mxu0 0.0
    %402 = vmatprep.subr.mxu0 0.0
    %403 = vmatpush1.msra.mxu0 0.0
    %404 = vmatprep.subr.mxu0 0.0
    %405 = vmatpush1.msra.mxu0 0.0
    %406 = vmatprep.subr.mxu0 0.0
    %407 = vmatpush1.msra.mxu0 0.0
    %408 = vmatprep.subr.mxu0 0.0
    %409 = vmatpush1.msra.mxu0 0.0
    %410 = vmatprep.subr.mxu0 0.0
    %411 = vmatpush1.msra.mxu0 0.0
    %412 = vmatprep.subr.mxu0 %v299
    %413 = vmatpush1.msra.mxu0 %v298
    %414 = vmatprep.subr.mxu0 %v266
    %415 = vmatpush1.msra.mxu0 %v265
    %416 = vmatprep.subr.mxu0 %v233
    %417 = vmatpush1.msra.mxu0 %v232
    %418 = vmatprep.subr.mxu0 %v99
    %419 = vmatpush1.msra.mxu0 %v98
    %420 = vmatprep.subr.mxu0 %v200
    %421 = vmatpush1.msra.mxu0 %v199
    %422 = vmatprep.subr.mxu0 %v167
    %423 = vmatpush1.msra.mxu0 %v166
    %424 = vmatprep.subr.mxu0 %v134
    %425 = vmatpush1.msra.mxu0 %v133
    %426 = vmatprep.subr.mxu0 0.0
    %427 = vmatpush2.msra.mxu0 0.0
    %428 = vmatprep.subr.mxu0 0.0
    %429 = vmatpush2.msra.mxu0 0.0
    %430 = vmatprep.subr.mxu0 0.0
    %431 = vmatpush2.msra.mxu0 0.0
    %432 = vmatprep.subr.mxu0 0.0
    %433 = vmatpush2.msra.mxu0 0.0
    %434 = vmatprep.subr.mxu0 0.0
    %435 = vmatpush2.msra.mxu0 0.0
    %436 = vmatprep.subr.mxu0 0.0
    %437 = vmatpush2.msra.mxu0 0.0
    %438 = vmatprep.subr.mxu0 0.0
    %439 = vmatpush2.msra.mxu0 0.0
    %440 = vmatprep.subr.mxu0 0.0
    %441 = vmatpush2.msra.mxu0 0.0
    %442 = vmatprep.subr.mxu0 0.0
    %443 = vmatpush2.msra.mxu0 0.0
    %444 = vmatprep.subr.mxu0 0.0
    %445 = vmatpush2.msra.mxu0 0.0
    %446 = vmatprep.subr.mxu0 0.0
    %447 = vmatpush2.msra.mxu0 0.0
    %448 = vmatprep.subr.mxu0 0.0
    %449 = vmatpush2.msra.mxu0 0.0
    %450 = vmatprep.subr.mxu0 0.0
    %451 = vmatpush2.msra.mxu0 0.0
    %452 = vmatprep.subr.mxu0 0.0
    %453 = vmatpush2.msra.mxu0 0.0
    %454 = vmatprep.subr.mxu0 0.0
    %455 = vmatpush2.msra.mxu0 0.0
    %456 = vmatprep.subr.mxu0 0.0
    %457 = vmatpush2.msra.mxu0 0.0
    %458 = vmatprep.mubr.f32.mxu0 0.0
    %459 = vmatmul.mubr.f32.gmra.mxu0 %v312
    %v460 = vpop.f32.mrf.mxu0
    %v461 = vadd.f32 %v303, %v460
    %v462 = vpop.f32.mrf.mxu0
    %v463 = vadd.f32 %v303, %v462
    %464 = vmatprep.mubr.f32.mxu0 0.0
    %465 = vmatmul.mubr.f32.gmra.mxu0 %v315
    %v466 = vpop.f32.mrf.mxu0
    %v467 = vadd.f32 %v308, %v466
    %v468 = vpop.f32.mrf.mxu0
    %v469 = vadd.f32 %v308, %v468
    %470 = vdwg.mxu0
    %v471 = vtanh.pop %v384
    %v472 = vtanh.pop %v386
    %v473 = vtanh.pop %v461
    %v474 = vtanh.pop %v463
    %v475 = vtanh.pop %v390
    %v476 = vtanh.pop %v392
    %v477 = vtanh.pop %v467
    %v478 = vtanh.pop %v469
    %479 = vrot.lane.b32.xlu0 %v471, 1
    %v480 = vpop.permute.xlu0 %479
    %481 = vrot.lane.b32.xlu0 %v475, 1
    %v482 = vpop.permute.xlu0 %481
    %483 = vrot.lane.b32.xlu0 %v472, 1
    %v484 = vpop.permute.xlu0 %483
    %485 = vrot.lane.b32.xlu0 %v476, 1
    %v486 = vpop.permute.xlu0 %485
    %487 = vrot.lane.b32.xlu0 %v473, 1
    %v488 = vpop.permute.xlu0 %487
    %489 = vrot.lane.b32.xlu0 %v477, 1
    %v490 = vpop.permute.xlu0 %489
    %491 = vrot.lane.b32.xlu0 %v474, 1
    %v492 = vpop.permute.xlu0 %491
    %493 = vrot.lane.b32.xlu0 %v478, 1
    %v494 = vpop.permute.xlu0 %493
    %v495 = vsel %vm176, %v488, %v492
    %v496 = vsel %vm176, %v490, %v494
    %v497 = vsel %vm176, %v484, %v488
    %v498 = vsel %vm176, %v486, %v490
    %v499 = vsel %vm176, %v480, %v484
    %v500 = vsel %vm176, %v482, %v486
    %v501 = vsel %vm176, %v492, %v480
    %v502 = vsel %vm176, %v494, %v482
    %v503 = vmul.f32 %v501, %v184
    %v504 = vmul.f32 %v499, %v188
    %v505 = vmul.f32 %v497, %v192
    %v506 = vmul.f32 %v495, %v196
    %v507 = vmul.f32 %v502, %v184
    %v508 = vmul.f32 %v500, %v188
    %v509 = vmul.f32 %v498, %v192
    %v510 = vmul.f32 %v496, %v196
    %511 = vrot.lane.b32.xlu0 %v471, 127
    %v512 = vpop.permute.xlu0 %511
    %513 = vrot.lane.b32.xlu0 %v475, 127
    %v514 = vpop.permute.xlu0 %513
    %515 = vrot.lane.b32.xlu0 %v472, 127
    %v516 = vpop.permute.xlu0 %515
    %517 = vrot.lane.b32.xlu0 %v476, 127
    %v518 = vpop.permute.xlu0 %517
    %519 = vrot.lane.b32.xlu0 %v473, 127
    %v520 = vpop.permute.xlu0 %519
    %521 = vrot.lane.b32.xlu0 %v477, 127
    %v522 = vpop.permute.xlu0 %521
    %523 = vrot.lane.b32.xlu0 %v474, 127
    %v524 = vpop.permute.xlu0 %523
    %525 = vrot.lane.b32.xlu0 %v478, 127
    %v526 = vpop.permute.xlu0 %525
    %v527 = vsel %vm209, %v520, %v524
    %v528 = vsel %vm209, %v522, %v526
    %v529 = vsel %vm209, %v516, %v520
    %v530 = vsel %vm209, %v518, %v522
    %v531 = vsel %vm209, %v512, %v516
    %v532 = vsel %vm209, %v514, %v518
    %v533 = vsel %vm209, %v524, %v512
    %v534 = vsel %vm209, %v526, %v514
    %v535 = vmul.f32 %v531, %v217
    %v536 = vmul.f32 %v529, %v221
    %v537 = vmul.f32 %v527, %v225
    %v538 = vmul.f32 %v533, %v229
    %v539 = vmul.f32 %v532, %v217
    %v540 = vmul.f32 %v530, %v221
    %v541 = vmul.f32 %v528, %v225
    %v542 = vmul.f32 %v534, %v229
    %544 = vset.pattern.permute.xlu0 0
    %545 = vperm.xlu0 %544, %v74
    %v546 = vpop.permute.xlu0 %545
    %549 = vset.pattern.permute.xlu0 0
    %550 = vperm.xlu0 %549, %v75
    %v551 = vpop.permute.xlu0 %550
    %554 = vset.pattern.permute.xlu0 0
    %555 = vperm.xlu0 %554, %v76
    %v556 = vpop.permute.xlu0 %555
    %559 = vset.pattern.permute.xlu0 0
    %560 = vperm.xlu0 %559, %v77
    %v561 = vpop.permute.xlu0 %560
    %vm563 = vcmask 392192
    %v565 = vsel %vm563, %v70, 0
    %v568 = vsel %vm563, %v71, 0
    %v571 = vsel %vm563, %v72, 0
    %v574 = vsel %vm563, %v73, 0
    %576 = vmatprep.subr.mxu0 0.0
    %577 = vmatpush1.msra.mxu0 0.0
    %578 = vmatprep.subr.mxu0 0.0
    %579 = vmatpush1.msra.mxu0 0.0
    %580 = vmatprep.subr.mxu0 0.0
    %581 = vmatpush1.msra.mxu0 0.0
    %582 = vmatprep.subr.mxu0 0.0
    %583 = vmatpush1.msra.mxu0 0.0
    %584 = vmatprep.subr.mxu0 0.0
    %585 = vmatpush1.msra.mxu0 0.0
    %586 = vmatprep.subr.mxu0 0.0
    %587 = vmatpush1.msra.mxu0 0.0
    %588 = vmatprep.subr.mxu0 0.0
    %589 = vmatpush1.msra.mxu0 0.0
    %590 = vmatprep.subr.mxu0 0.0
    %591 = vmatpush1.msra.mxu0 0.0
    %592 = vmatprep.subr.mxu0 0.0
    %593 = vmatpush1.msra.mxu0 0.0
    %594 = vmatprep.subr.mxu0 0.0
    %595 = vmatpush1.msra.mxu0 0.0
    %596 = vmatprep.subr.mxu0 %v540
    %597 = vmatpush1.msra.mxu0 %v539
    %598 = vmatprep.subr.mxu0 %v536
    %599 = vmatpush1.msra.mxu0 %v535
    %600 = vmatprep.subr.mxu0 %v476
    %601 = vmatpush1.msra.mxu0 %v475
    %602 = vmatprep.subr.mxu0 %v472
    %603 = vmatpush1.msra.mxu0 %v471
    %604 = vmatprep.subr.mxu0 %v508
    %605 = vmatpush1.msra.mxu0 %v507
    %606 = vmatprep.subr.mxu0 %v504
    %607 = vmatpush1.msra.mxu0 %v503
    %608 = vmatprep.subr.mxu0 0.0
    %609 = vmatpush2.msra.mxu0 0.0
    %610 = vmatprep.subr.mxu0 0.0
    %611 = vmatpush2.msra.mxu0 0.0
    %612 = vmatprep.subr.mxu0 0.0
    %613 = vmatpush2.msra.mxu0 0.0
    %614 = vmatprep.subr.mxu0 0.0
    %615 = vmatpush2.msra.mxu0 0.0
    %616 = vmatprep.subr.mxu0 0.0
    %617 = vmatpush2.msra.mxu0 0.0
    %618 = vmatprep.subr.mxu0 0.0
    %619 = vmatpush2.msra.mxu0 0.0
    %620 = vmatprep.subr.mxu0 0.0
    %621 = vmatpush2.msra.mxu0 0.0
    %622 = vmatprep.subr.mxu0 0.0
    %623 = vmatpush2.msra.mxu0 0.0
    %624 = vmatprep.subr.mxu0 0.0
    %625 = vmatpush2.msra.mxu0 0.0
    %626 = vmatprep.subr.mxu0 0.0
    %627 = vmatpush2.msra.mxu0 0.0
    %628 = vmatprep.subr.mxu0 0.0
    %629 = vmatpush2.msra.mxu0 0.0
    %630 = vmatprep.subr.mxu0 0.0
    %631 = vmatpush2.msra.mxu0 0.0
    %632 = vmatprep.subr.mxu0 0.0
    %633 = vmatpush2.msra.mxu0 0.0
    %634 = vmatprep.subr.mxu0 0.0
    %635 = vmatpush2.msra.mxu0 0.0
    %636 = vmatprep.subr.mxu0 0.0
    %637 = vmatpush2.msra.mxu0 0.0
    %638 = vmatprep.subr.mxu0 0.0
    %639 = vmatpush2.msra.mxu0 0.0
    %640 = vmatprep.mubr.f32.mxu0 0.0
    %641 = vmatmul.mubr.f32.gmra.mxu0 %v565
    %v642 = vpop.f32.mrf.mxu0
    %v643 = vadd.f32 %v546, %v642
    %v644 = vpop.f32.mrf.mxu0
    %v645 = vadd.f32 %v546, %v644
    %646 = vmatprep.mubr.f32.mxu0 0.0
    %647 = vmatmul.mubr.f32.gmra.mxu0 %v568
    %v648 = vpop.f32.mrf.mxu0
    %v649 = vadd.f32 %v551, %v648
    %v650 = vpop.f32.mrf.mxu0
    %v651 = vadd.f32 %v551, %v650
    %652 = vmatprep.mubr.f32.mxu0 0.0
    %653 = vmatmul.mubr.f32.gmra.mxu0 %v571
    %v654 = vpop.f32.mrf.mxu0
    %v655 = vadd.f32 %v556, %v654
    %v656 = vpop.f32.mrf.mxu0
    %v657 = vadd.f32 %v556, %v656
    %658 = vmatprep.mubr.f32.mxu0 0.0
    %659 = vmatmul.mubr.f32.gmra.mxu0 %v574
    %v660 = vpop.f32.mrf.mxu0
    %v661 = vadd.f32 %v561, %v660
    %v662 = vpop.f32.mrf.mxu0
    %v663 = vadd.f32 %v561, %v662
    %664 = vdwg.mxu0
    %665 = vmatprep.subr.mxu0 0.0
    %666 = vmatpush1.msra.mxu0 0.0
    %667 = vmatprep.subr.mxu0 0.0
    %668 = vmatpush1.msra.mxu0 0.0
    %669 = vmatprep.subr.mxu0 0.0
    %670 = vmatpush1.msra.mxu0 0.0
    %671 = vmatprep.subr.mxu0 0.0
    %672 = vmatpush1.msra.mxu0 0.0
    %673 = vmatprep.subr.mxu0 0.0
    %674 = vmatpush1.msra.mxu0 0.0
    %675 = vmatprep.subr.mxu0 0.0
    %676 = vmatpush1.msra.mxu0 0.0
    %677 = vmatprep.subr.mxu0 0.0
    %678 = vmatpush1.msra.mxu0 0.0
    %679 = vmatprep.subr.mxu0 0.0
    %680 = vmatpush1.msra.mxu0 0.0
    %681 = vmatprep.subr.mxu0 0.0
    %682 = vmatpush1.msra.mxu0 0.0
    %683 = vmatprep.subr.mxu0 0.0
    %684 = vmatpush1.msra.mxu0 0.0
    %685 = vmatprep.subr.mxu0 %v542
    %686 = vmatpush1.msra.mxu0 %v541
    %687 = vmatprep.subr.mxu0 %v538
    %688 = vmatpush1.msra.mxu0 %v537
    %689 = vmatprep.subr.mxu0 %v478
    %690 = vmatpush1.msra.mxu0 %v477
    %691 = vmatprep.subr.mxu0 %v474
    %692 = vmatpush1.msra.mxu0 %v473
    %693 = vmatprep.subr.mxu0 %v510
    %694 = vmatpush1.msra.mxu0 %v509
    %695 = vmatprep.subr.mxu0 %v506
    %696 = vmatpush1.msra.mxu0 %v505
    %697 = vmatprep.subr.mxu0 0.0
    %698 = vmatpush2.msra.mxu0 0.0
    %699 = vmatprep.subr.mxu0 0.0
    %700 = vmatpush2.msra.mxu0 0.0
    %701 = vmatprep.subr.mxu0 0.0
    %702 = vmatpush2.msra.mxu0 0.0
    %703 = vmatprep.subr.mxu0 0.0
    %704 = vmatpush2.msra.mxu0 0.0
    %705 = vmatprep.subr.mxu0 0.0
    %706 = vmatpush2.msra.mxu0 0.0
    %707 = vmatprep.subr.mxu0 0.0
    %708 = vmatpush2.msra.mxu0 0.0
    %709 = vmatprep.subr.mxu0 0.0
    %710 = vmatpush2.msra.mxu0 0.0
    %711 = vmatprep.subr.mxu0 0.0
    %712 = vmatpush2.msra.mxu0 0.0
    %713 = vmatprep.subr.mxu0 0.0
    %714 = vmatpush2.msra.mxu0 0.0
    %715 = vmatprep.subr.mxu0 0.0
    %716 = vmatpush2.msra.mxu0 0.0
    %717 = vmatprep.subr.mxu0 0.0
    %718 = vmatpush2.msra.mxu0 0.0
    %719 = vmatprep.subr.mxu0 0.0
    %720 = vmatpush2.msra.mxu0 0.0
    %721 = vmatprep.subr.mxu0 0.0
    %722 = vmatpush2.msra.mxu0 0.0
    %723 = vmatprep.subr.mxu0 0.0
    %724 = vmatpush2.msra.mxu0 0.0
    %725 = vmatprep.subr.mxu0 0.0
    %726 = vmatpush2.msra.mxu0 0.0
    %727 = vmatprep.subr.mxu0 0.0
    %728 = vmatpush2.msra.mxu0 0.0
    %729 = vmatprep.mubr.f32.mxu0 0.0
    %730 = vmatmul.mubr.f32.gmra.mxu0 %v565
    %v731 = vpop.f32.mrf.mxu0
    %v732 = vadd.f32 %v546, %v731
    %v733 = vpop.f32.mrf.mxu0
    %v734 = vadd.f32 %v546, %v733
    %735 = vmatprep.mubr.f32.mxu0 0.0
    %736 = vmatmul.mubr.f32.gmra.mxu0 %v568
    %v737 = vpop.f32.mrf.mxu0
    %v738 = vadd.f32 %v551, %v737
    %v739 = vpop.f32.mrf.mxu0
    %v740 = vadd.f32 %v551, %v739
    %741 = vmatprep.mubr.f32.mxu0 0.0
    %742 = vmatmul.mubr.f32.gmra.mxu0 %v571
    %v743 = vpop.f32.mrf.mxu0
    %v744 = vadd.f32 %v556, %v743
    %v745 = vpop.f32.mrf.mxu0
    %v746 = vadd.f32 %v556, %v745
    %747 = vmatprep.mubr.f32.mxu0 0.0
    %748 = vmatmul.mubr.f32.gmra.mxu0 %v574
    %v749 = vpop.f32.mrf.mxu0
    %v750 = vadd.f32 %v561, %v749
    %v751 = vpop.f32.mrf.mxu0
    %v752 = vadd.f32 %v561, %v751
    %753 = vdwg.mxu0
    %v754 = vtanh.pop %v643
    %v755 = vtanh.pop %v645
    %v756 = vtanh.pop %v732
    %v757 = vtanh.pop %v734
    %v758 = vtanh.pop %v649
    %v759 = vtanh.pop %v651
    %v760 = vtanh.pop %v738
    %v761 = vtanh.pop %v740
    %v762 = vtanh.pop %v655
    %v763 = vtanh.pop %v657
    %v764 = vtanh.pop %v744
    %v765 = vtanh.pop %v746
    %v766 = vtanh.pop %v661
    %v767 = vtanh.pop %v663
    %v768 = vtanh.pop %v750
    %v769 = vtanh.pop %v752
    %770 = vrot.lane.b32.xlu0 %v754, 1
    %v771 = vpop.permute.xlu0 %770
    %772 = vrot.lane.b32.xlu0 %v758, 1
    %v773 = vpop.permute.xlu0 %772
    %774 = vrot.lane.b32.xlu0 %v762, 1
    %v775 = vpop.permute.xlu0 %774
    %776 = vrot.lane.b32.xlu0 %v766, 1
    %v777 = vpop.permute.xlu0 %776
    %778 = vrot.lane.b32.xlu0 %v755, 1
    %v779 = vpop.permute.xlu0 %778
    %780 = vrot.lane.b32.xlu0 %v759, 1
    %v781 = vpop.permute.xlu0 %780
    %782 = vrot.lane.b32.xlu0 %v763, 1
    %v783 = vpop.permute.xlu0 %782
    %784 = vrot.lane.b32.xlu0 %v767, 1
    %v785 = vpop.permute.xlu0 %784
    %786 = vrot.lane.b32.xlu0 %v756, 1
    %v787 = vpop.permute.xlu0 %786
    %788 = vrot.lane.b32.xlu0 %v760, 1
    %v789 = vpop.permute.xlu0 %788
    %790 = vrot.lane.b32.xlu0 %v764, 1
    %v791 = vpop.permute.xlu0 %790
    %792 = vrot.lane.b32.xlu0 %v768, 1
    %v793 = vpop.permute.xlu0 %792
    %794 = vrot.lane.b32.xlu0 %v757, 1
    %v795 = vpop.permute.xlu0 %794
    %796 = vrot.lane.b32.xlu0 %v761, 1
    %v797 = vpop.permute.xlu0 %796
    %798 = vrot.lane.b32.xlu0 %v765, 1
    %v799 = vpop.permute.xlu0 %798
    %800 = vrot.lane.b32.xlu0 %v769, 1
    %v801 = vpop.permute.xlu0 %800
    %v802 = vsel %vm176, %v787, %v795
    %v803 = vsel %vm176, %v789, %v797
    %v804 = vsel %vm176, %v791, %v799
    %v805 = vsel %vm176, %v793, %v801
    %v806 = vsel %vm176, %v779, %v787
    %v807 = vsel %vm176, %v781, %v789
    %v808 = vsel %vm176, %v783, %v791
    %v809 = vsel %vm176, %v785, %v793
    %v810 = vsel %vm176, %v771, %v779
    %v811 = vsel %vm176, %v773, %v781
    %v812 = vsel %vm176, %v775, %v783
    %v813 = vsel %vm176, %v777, %v785
    %v814 = vsel %vm176, %v795, %v771
    %v815 = vsel %vm176, %v797, %v773
    %v816 = vsel %vm176, %v799, %v775
    %v817 = vsel %vm176, %v801, %v777
    %v818 = vmul.f32 %v814, %v184
    %v819 = vmul.f32 %v810, %v188
    %v820 = vmul.f32 %v806, %v192
    %v821 = vmul.f32 %v802, %v196
    %v822 = vmul.f32 %v815, %v184
    %v823 = vmul.f32 %v811, %v188
    %v824 = vmul.f32 %v807, %v192
    %v825 = vmul.f32 %v803, %v196
    %v826 = vmul.f32 %v816, %v184
    %v827 = vmul.f32 %v812, %v188
    %v828 = vmul.f32 %v808, %v192
    %v829 = vmul.f32 %v804, %v196
    %v830 = vmul.f32 %v817, %v184
    %v831 = vmul.f32 %v813, %v188
    %v832 = vmul.f32 %v809, %v192
    %v833 = vmul.f32 %v805, %v196
    %834 = vrot.lane.b32.xlu0 %v754, 127
    %v835 = vpop.permute.xlu0 %834
    %836 = vrot.lane.b32.xlu0 %v758, 127
    %v837 = vpop.permute.xlu0 %836
    %838 = vrot.lane.b32.xlu0 %v762, 127
    %v839 = vpop.permute.xlu0 %838
    %840 = vrot.lane.b32.xlu0 %v766, 127
    %v841 = vpop.permute.xlu0 %840
    %842 = vrot.lane.b32.xlu0 %v755, 127
    %v843 = vpop.permute.xlu0 %842
    %844 = vrot.lane.b32.xlu0 %v759, 127
    %v845 = vpop.permute.xlu0 %844
    %846 = vrot.lane.b32.xlu0 %v763, 127
    %v847 = vpop.permute.xlu0 %846
    %848 = vrot.lane.b32.xlu0 %v767, 127
    %v849 = vpop.permute.xlu0 %848
    %850 = vrot.lane.b32.xlu0 %v756, 127
    %v851 = vpop.permute.xlu0 %850
    %852 = vrot.lane.b32.xlu0 %v760, 127
    %v853 = vpop.permute.xlu0 %852
    %854 = vrot.lane.b32.xlu0 %v764, 127
    %v855 = vpop.permute.xlu0 %854
    %856 = vrot.lane.b32.xlu0 %v768, 127
    %v857 = vpop.permute.xlu0 %856
    %858 = vrot.lane.b32.xlu0 %v757, 127
    %v859 = vpop.permute.xlu0 %858
    %860 = vrot.lane.b32.xlu0 %v761, 127
    %v861 = vpop.permute.xlu0 %860
    %862 = vrot.lane.b32.xlu0 %v765, 127
    %v863 = vpop.permute.xlu0 %862
    %864 = vrot.lane.b32.xlu0 %v769, 127
    %v865 = vpop.permute.xlu0 %864
    %v866 = vsel %vm209, %v851, %v859
    %v867 = vsel %vm209, %v853, %v861
    %v868 = vsel %vm209, %v855, %v863
    %v869 = vsel %vm209, %v857, %v865
    %v870 = vsel %vm209, %v843, %v851
    %v871 = vsel %vm209, %v845, %v853
    %v872 = vsel %vm209, %v847, %v855
    %v873 = vsel %vm209, %v849, %v857
    %v874 = vsel %vm209, %v835, %v843
    %v875 = vsel %vm209, %v837, %v845
    %v876 = vsel %vm209, %v839, %v847
    %v877 = vsel %vm209, %v841, %v849
    %v878 = vsel %vm209, %v859, %v835
    %v879 = vsel %vm209, %v861, %v837
    %v880 = vsel %vm209, %v863, %v839
    %v881 = vsel %vm209, %v865, %v841
    %v882 = vmul.f32 %v874, %v217
    %v883 = vmul.f32 %v870, %v221
    %v884 = vmul.f32 %v866, %v225
    %v885 = vmul.f32 %v878, %v229
    %v886 = vmul.f32 %v875, %v217
    %v887 = vmul.f32 %v871, %v221
    %v888 = vmul.f32 %v867, %v225
    %v889 = vmul.f32 %v879, %v229
    %v890 = vmul.f32 %v876, %v217
    %v891 = vmul.f32 %v872, %v221
    %v892 = vmul.f32 %v868, %v225
    %v893 = vmul.f32 %v880, %v229
    %v894 = vmul.f32 %v877, %v217
    %v895 = vmul.f32 %v873, %v221
    %v896 = vmul.f32 %v869, %v225
    %v897 = vmul.f32 %v881, %v229
    %899 = vset.pattern.permute.xlu0 0
    %900 = vperm.xlu0 %899, %v86
    %v901 = vpop.permute.xlu0 %900
    %904 = vset.pattern.permute.xlu0 0
    %905 = vperm.xlu0 %904, %v87
    %v906 = vpop.permute.xlu0 %905
    %909 = vset.pattern.permute.xlu0 0
    %910 = vperm.xlu0 %909, %v88
    %v911 = vpop.permute.xlu0 %910
    %914 = vset.pattern.permute.xlu0 0
    %915 = vperm.xlu0 %914, %v89
    %v916 = vpop.permute.xlu0 %915
    %919 = vset.pattern.permute.xlu0 0
    %920 = vperm.xlu0 %919, %v90
    %v921 = vpop.permute.xlu0 %920
    %924 = vset.pattern.permute.xlu0 0
    %925 = vperm.xlu0 %924, %v91
    %v926 = vpop.permute.xlu0 %925
    %929 = vset.pattern.permute.xlu0 0
    %930 = vperm.xlu0 %929, %v92
    %v931 = vpop.permute.xlu0 %930
    %934 = vset.pattern.permute.xlu0 0
    %935 = vperm.xlu0 %934, %v93
    %v936 = vpop.permute.xlu0 %935
    %vm938 = vcmask 785408
    %v940 = vsel %vm938, %v78, 0
    %v943 = vsel %vm938, %v79, 0
    %v946 = vsel %vm938, %v80, 0
    %v949 = vsel %vm938, %v81, 0
    %v952 = vsel %vm938, %v82, 0
    %v955 = vsel %vm938, %v83, 0
    %v958 = vsel %vm938, %v84, 0
    %v961 = vsel %vm938, %v85, 0
    %963 = vmatprep.subr.mxu0 0.0
    %964 = vmatpush1.msra.mxu0 0.0
    %965 = vmatprep.subr.mxu0 0.0
    %966 = vmatpush1.msra.mxu0 0.0
    %967 = vmatprep.subr.mxu0 0.0
    %968 = vmatpush1.msra.mxu0 0.0
    %969 = vmatprep.subr.mxu0 0.0
    %970 = vmatpush1.msra.mxu0 0.0
    %971 = vmatprep.subr.mxu0 %v895
    %972 = vmatpush1.msra.mxu0 %v894
    %973 = vmatprep.subr.mxu0 %v891
    %974 = vmatpush1.msra.mxu0 %v890
    %975 = vmatprep.subr.mxu0 %v887
    %976 = vmatpush1.msra.mxu0 %v886
    %977 = vmatprep.subr.mxu0 %v883
    %978 = vmatpush1.msra.mxu0 %v882
    %979 = vmatprep.subr.mxu0 %v767
    %980 = vmatpush1.msra.mxu0 %v766
    %981 = vmatprep.subr.mxu0 %v763
    %982 = vmatpush1.msra.mxu0 %v762
    %983 = vmatprep.subr.mxu0 %v759
    %984 = vmatpush1.msra.mxu0 %v758
    %985 = vmatprep.subr.mxu0 %v755
    %986 = vmatpush1.msra.mxu0 %v754
    %987 = vmatprep.subr.mxu0 %v831
    %988 = vmatpush1.msra.mxu0 %v830
    %989 = vmatprep.subr.mxu0 %v827
    %990 = vmatpush1.msra.mxu0 %v826
    %991 = vmatprep.subr.mxu0 %v823
    %992 = vmatpush1.msra.mxu0 %v822
    %993 = vmatprep.subr.mxu0 %v819
    %994 = vmatpush1.msra.mxu0 %v818
    %995 = vmatprep.subr.mxu0 0.0
    %996 = vmatpush2.msra.mxu0 0.0
    %997 = vmatprep.subr.mxu0 0.0
    %998 = vmatpush2.msra.mxu0 0.0
    %999 = vmatprep.subr.mxu0 0.0
    %1000 = vmatpush2.msra.mxu0 0.0
    %1001 = vmatprep.subr.mxu0 0.0
    %1002 = vmatpush2.msra.mxu0 0.0
    %1003 = vmatprep.subr.mxu0 0.0
    %1004 = vmatpush2.msra.mxu0 0.0
    %1005 = vmatprep.subr.mxu0 0.0
    %1006 = vmatpush2.msra.mxu0 0.0
    %1007 = vmatprep.subr.mxu0 0.0
    %1008 = vmatpush2.msra.mxu0 0.0
    %1009 = vmatprep.subr.mxu0 0.0
    %1010 = vmatpush2.msra.mxu0 0.0
    %1011 = vmatprep.subr.mxu0 0.0
    %1012 = vmatpush2.msra.mxu0 0.0
    %1013 = vmatprep.subr.mxu0 0.0
    %1014 = vmatpush2.msra.mxu0 0.0
    %1015 = vmatprep.subr.mxu0 0.0
    %1016 = vmatpush2.msra.mxu0 0.0
    %1017 = vmatprep.subr.mxu0 0.0
    %1018 = vmatpush2.msra.mxu0 0.0
    %1019 = vmatprep.subr.mxu0 0.0
    %1020 = vmatpush2.msra.mxu0 0.0
    %1021 = vmatprep.subr.mxu0 0.0
    %1022 = vmatpush2.msra.mxu0 0.0
    %1023 = vmatprep.subr.mxu0 0.0
    %1024 = vmatpush2.msra.mxu0 0.0
    %1025 = vmatprep.subr.mxu0 0.0
    %1026 = vmatpush2.msra.mxu0 0.0
    %1027 = vmatprep.mubr.f32.mxu0 0.0
    %1028 = vmatmul.mubr.f32.gmra.mxu0 %v940
    %v1029 = vpop.f32.mrf.mxu0
    %v1030 = vadd.f32 %v901, %v1029
    %v1031 = vpop.f32.mrf.mxu0
    %v1032 = vadd.f32 %v901, %v1031
    %1033 = vmatprep.mubr.f32.mxu0 0.0
    %1034 = vmatmul.mubr.f32.gmra.mxu0 %v943
    %v1035 = vpop.f32.mrf.mxu0
    %v1036 = vadd.f32 %v906, %v1035
    %v1037 = vpop.f32.mrf.mxu0
    %v1038 = vadd.f32 %v906, %v1037
    %1039 = vmatprep.mubr.f32.mxu0 0.0
    %1040 = vmatmul.mubr.f32.gmra.mxu0 %v946
    %v1041 = vpop.f32.mrf.mxu0
    %v1042 = vadd.f32 %v911, %v1041
    %v1043 = vpop.f32.mrf.mxu0
    %v1044 = vadd.f32 %v911, %v1043
    %1045 = vmatprep.mubr.f32.mxu0 0.0
    %1046 = vmatmul.mubr.f32.gmra.mxu0 %v949
    %v1047 = vpop.f32.mrf.mxu0
    %v1048 = vadd.f32 %v916, %v1047
    %v1049 = vpop.f32.mrf.mxu0
    %v1050 = vadd.f32 %v916, %v1049
    %1051 = vmatprep.mubr.f32.mxu0 0.0
    %1052 = vmatmul.mubr.f32.gmra.mxu0 %v952
    %v1053 = vpop.f32.mrf.mxu0
    %v1054 = vadd.f32 %v921, %v1053
    %v1055 = vpop.f32.mrf.mxu0
    %v1056 = vadd.f32 %v921, %v1055
    %1057 = vmatprep.mubr.f32.mxu0 0.0
    %1058 = vmatmul.mubr.f32.gmra.mxu0 %v955
    %v1059 = vpop.f32.mrf.mxu0
    %v1060 = vadd.f32 %v926, %v1059
    %v1061 = vpop.f32.mrf.mxu0
    %v1062 = vadd.f32 %v926, %v1061
    %1063 = vmatprep.mubr.f32.mxu0 0.0
    %1064 = vmatmul.mubr.f32.gmra.mxu0 %v958
    %v1065 = vpop.f32.mrf.mxu0
    %v1066 = vadd.f32 %v931, %v1065
    %v1067 = vpop.f32.mrf.mxu0
    %v1068 = vadd.f32 %v931, %v1067
    %1069 = vmatprep.mubr.f32.mxu0 0.0
    %1070 = vmatmul.mubr.f32.gmra.mxu0 %v961
    %v1071 = vpop.f32.mrf.mxu0
    %v1072 = vadd.f32 %v936, %v1071
    %v1073 = vpop.f32.mrf.mxu0
    %v1074 = vadd.f32 %v936, %v1073
    %1075 = vdwg.mxu0
    %1076 = vmatprep.subr.mxu0 0.0
    %1077 = vmatpush1.msra.mxu0 0.0
    %1078 = vmatprep.subr.mxu0 0.0
    %1079 = vmatpush1.msra.mxu0 0.0
    %1080 = vmatprep.subr.mxu0 0.0
    %1081 = vmatpush1.msra.mxu0 0.0
    %1082 = vmatprep.subr.mxu0 0.0
    %1083 = vmatpush1.msra.mxu0 0.0
    %1084 = vmatprep.subr.mxu0 %v897
    %1085 = vmatpush1.msra.mxu0 %v896
    %1086 = vmatprep.subr.mxu0 %v893
    %1087 = vmatpush1.msra.mxu0 %v892
    %1088 = vmatprep.subr.mxu0 %v889
    %1089 = vmatpush1.msra.mxu0 %v888
    %1090 = vmatprep.subr.mxu0 %v885
    %1091 = vmatpush1.msra.mxu0 %v884
    %1092 = vmatprep.subr.mxu0 %v769
    %1093 = vmatpush1.msra.mxu0 %v768
    %1094 = vmatprep.subr.mxu0 %v765
    %1095 = vmatpush1.msra.mxu0 %v764
    %1096 = vmatprep.subr.mxu0 %v761
    %1097 = vmatpush1.msra.mxu0 %v760
    %1098 = vmatprep.subr.mxu0 %v757
    %1099 = vmatpush1.msra.mxu0 %v756
    %1100 = vmatprep.subr.mxu0 %v833
    %1101 = vmatpush1.msra.mxu0 %v832
    %1102 = vmatprep.subr.mxu0 %v829
    %1103 = vmatpush1.msra.mxu0 %v828
    %1104 = vmatprep.subr.mxu0 %v825
    %1105 = vmatpush1.msra.mxu0 %v824
    %1106 = vmatprep.subr.mxu0 %v821
    %1107 = vmatpush1.msra.mxu0 %v820
    %1108 = vmatprep.subr.mxu0 0.0
    %1109 = vmatpush2.msra.mxu0 0.0
    %1110 = vmatprep.subr.mxu0 0.0
    %1111 = vmatpush2.msra.mxu0 0.0
    %1112 = vmatprep.subr.mxu0 0.0
    %1113 = vmatpush2.msra.mxu0 0.0
    %1114 = vmatprep.subr.mxu0 0.0
    %1115 = vmatpush2.msra.mxu0 0.0
    %1116 = vmatprep.subr.mxu0 0.0
    %1117 = vmatpush2.msra.mxu0 0.0
    %1118 = vmatprep.subr.mxu0 0.0
    %1119 = vmatpush2.msra.mxu0 0.0
    %1120 = vmatprep.subr.mxu0 0.0
    %1121 = vmatpush2.msra.mxu0 0.0
    %1122 = vmatprep.subr.mxu0 0.0
    %1123 = vmatpush2.msra.mxu0 0.0
    %1124 = vmatprep.subr.mxu0 0.0
    %1125 = vmatpush2.msra.mxu0 0.0
    %1126 = vmatprep.subr.mxu0 0.0
    %1127 = vmatpush2.msra.mxu0 0.0
    %1128 = vmatprep.subr.mxu0 0.0
    %1129 = vmatpush2.msra.mxu0 0.0
    %1130 = vmatprep.subr.mxu0 0.0
    %1131 = vmatpush2.msra.mxu0 0.0
    %1132 = vmatprep.subr.mxu0 0.0
    %1133 = vmatpush2.msra.mxu0 0.0
    %1134 = vmatprep.subr.mxu0 0.0
    %1135 = vmatpush2.msra.mxu0 0.0
    %1136 = vmatprep.subr.mxu0 0.0
    %1137 = vmatpush2.msra.mxu0 0.0
    %1138 = vmatprep.subr.mxu0 0.0
    %1139 = vmatpush2.msra.mxu0 0.0
    %1140 = vmatprep.mubr.f32.mxu0 0.0
    %1141 = vmatmul.mubr.f32.gmra.mxu0 %v940
    %v1142 = vpop.f32.mrf.mxu0
    %v1143 = vadd.f32 %v901, %v1142
    %v1144 = vpop.f32.mrf.mxu0
    %v1145 = vadd.f32 %v901, %v1144
    %1146 = vmatprep.mubr.f32.mxu0 0.0
    %1147 = vmatmul.mubr.f32.gmra.mxu0 %v943
    %v1148 = vpop.f32.mrf.mxu0
    %v1149 = vadd.f32 %v906, %v1148
    %v1150 = vpop.f32.mrf.mxu0
    %v1151 = vadd.f32 %v906, %v1150
    %1152 = vmatprep.mubr.f32.mxu0 0.0
    %1153 = vmatmul.mubr.f32.gmra.mxu0 %v946
    %v1154 = vpop.f32.mrf.mxu0
    %v1155 = vadd.f32 %v911, %v1154
    %v1156 = vpop.f32.mrf.mxu0
    %v1157 = vadd.f32 %v911, %v1156
    %1158 = vmatprep.mubr.f32.mxu0 0.0
    %1159 = vmatmul.mubr.f32.gmra.mxu0 %v949
    %v1160 = vpop.f32.mrf.mxu0
    %v1161 = vadd.f32 %v916, %v1160
    %v1162 = vpop.f32.mrf.mxu0
    %v1163 = vadd.f32 %v916, %v1162
    %1164 = vmatprep.mubr.f32.mxu0 0.0
    %1165 = vmatmul.mubr.f32.gmra.mxu0 %v952
    %v1166 = vpop.f32.mrf.mxu0
    %v1167 = vadd.f32 %v921, %v1166
    %v1168 = vpop.f32.mrf.mxu0
    %v1169 = vadd.f32 %v921, %v1168
    %1170 = vmatprep.mubr.f32.mxu0 0.0
    %1171 = vmatmul.mubr.f32.gmra.mxu0 %v955
    %v1172 = vpop.f32.mrf.mxu0
    %v1173 = vadd.f32 %v926, %v1172
    %v1174 = vpop.f32.mrf.mxu0
    %v1175 = vadd.f32 %v926, %v1174
    %1176 = vmatprep.mubr.f32.mxu0 0.0
    %1177 = vmatmul.mubr.f32.gmra.mxu0 %v958
    %v1178 = vpop.f32.mrf.mxu0
    %v1179 = vadd.f32 %v931, %v1178
    %v1180 = vpop.f32.mrf.mxu0
    %v1181 = vadd.f32 %v931, %v1180
    %1182 = vmatprep.mubr.f32.mxu0 0.0
    %1183 = vmatmul.mubr.f32.gmra.mxu0 %v961
    %v1184 = vpop.f32.mrf.mxu0
    %v1185 = vadd.f32 %v936, %v1184
    %v1186 = vpop.f32.mrf.mxu0
    %v1187 = vadd.f32 %v936, %v1186
    %1188 = vdwg.mxu0
    %v1189 = vtanh.pop %v1030
    %v1190 = vtanh.pop %v1032
    %v1191 = vtanh.pop %v1143
    %v1192 = vtanh.pop %v1145
    %v1193 = vtanh.pop %v1036
    %v1194 = vtanh.pop %v1038
    %v1195 = vtanh.pop %v1149
    %v1196 = vtanh.pop %v1151
    %v1197 = vtanh.pop %v1042
    %v1198 = vtanh.pop %v1044
    %v1199 = vtanh.pop %v1155
    %v1200 = vtanh.pop %v1157
    %v1201 = vtanh.pop %v1048
    %v1202 = vtanh.pop %v1050
    %v1203 = vtanh.pop %v1161
    %v1204 = vtanh.pop %v1163
    %v1205 = vtanh.pop %v1054
    %v1206 = vtanh.pop %v1056
    %v1207 = vtanh.pop %v1167
    %v1208 = vtanh.pop %v1169
    %v1209 = vtanh.pop %v1060
    %v1210 = vtanh.pop %v1062
    %v1211 = vtanh.pop %v1173
    %v1212 = vtanh.pop %v1175
    %v1213 = vtanh.pop %v1066
    %v1214 = vtanh.pop %v1068
    %v1215 = vtanh.pop %v1179
    %v1216 = vtanh.pop %v1181
    %v1217 = vtanh.pop %v1072
    %v1218 = vtanh.pop %v1074
    %v1219 = vtanh.pop %v1185
    %v1220 = vtanh.pop %v1187
    %1222 = vset.pattern.permute.xlu0 0
    %1223 = vperm.xlu0 %1222, %v95
    %v1224 = vpop.permute.xlu0 %1223
    %vm1226 = vcmask 523264
    %v1228 = vsel %vm1226, %v94, 0
    %1230 = vmatprep.subr.mxu0 0.0
    %1231 = vmatpush1.msra.mxu0 0.0
    %1232 = vmatprep.subr.mxu0 0.0
    %1233 = vmatpush1.msra.mxu0 0.0
    %1234 = vmatprep.subr.mxu0 0.0
    %1235 = vmatpush1.msra.mxu0 0.0
    %1236 = vmatprep.subr.mxu0 0.0
    %1237 = vmatpush1.msra.mxu0 0.0
    %1238 = vmatprep.subr.mxu0 0.0
    %1239 = vmatpush1.msra.mxu0 0.0
    %1240 = vmatprep.subr.mxu0 0.0
    %1241 = vmatpush1.msra.mxu0 0.0
    %1242 = vmatprep.subr.mxu0 0.0
    %1243 = vmatpush1.msra.mxu0 0.0
    %1244 = vmatprep.subr.mxu0 0.0
    %1245 = vmatpush1.msra.mxu0 0.0
    %1246 = vmatprep.subr.mxu0 %v1218
    %1247 = vmatpush1.msra.mxu0 %v1217
    %1248 = vmatprep.subr.mxu0 %v1214
    %1249 = vmatpush1.msra.mxu0 %v1213
    %1250 = vmatprep.subr.mxu0 %v1210
    %1251 = vmatpush1.msra.mxu0 %v1209
    %1252 = vmatprep.subr.mxu0 %v1206
    %1253 = vmatpush1.msra.mxu0 %v1205
    %1254 = vmatprep.subr.mxu0 %v1202
    %1255 = vmatpush1.msra.mxu0 %v1201
    %1256 = vmatprep.subr.mxu0 %v1198
    %1257 = vmatpush1.msra.mxu0 %v1197
    %1258 = vmatprep.subr.mxu0 %v1194
    %1259 = vmatpush1.msra.mxu0 %v1193
    %1260 = vmatprep.subr.mxu0 %v1190
    %1261 = vmatpush1.msra.mxu0 %v1189
    %1262 = vmatprep.subr.mxu0 0.0
    %1263 = vmatpush2.msra.mxu0 0.0
    %1264 = vmatprep.subr.mxu0 0.0
    %1265 = vmatpush2.msra.mxu0 0.0
    %1266 = vmatprep.subr.mxu0 0.0
    %1267 = vmatpush2.msra.mxu0 0.0
    %1268 = vmatprep.subr.mxu0 0.0
    %1269 = vmatpush2.msra.mxu0 0.0
    %1270 = vmatprep.subr.mxu0 0.0
    %1271 = vmatpush2.msra.mxu0 0.0
    %1272 = vmatprep.subr.mxu0 0.0
    %1273 = vmatpush2.msra.mxu0 0.0
    %1274 = vmatprep.subr.mxu0 0.0
    %1275 = vmatpush2.msra.mxu0 0.0
    %1276 = vmatprep.subr.mxu0 0.0
    %1277 = vmatpush2.msra.mxu0 0.0
    %1278 = vmatprep.subr.mxu0 0.0
    %1279 = vmatpush2.msra.mxu0 0.0
    %1280 = vmatprep.subr.mxu0 0.0
    %1281 = vmatpush2.msra.mxu0 0.0
    %1282 = vmatprep.subr.mxu0 0.0
    %1283 = vmatpush2.msra.mxu0 0.0
    %1284 = vmatprep.subr.mxu0 0.0
    %1285 = vmatpush2.msra.mxu0 0.0
    %1286 = vmatprep.subr.mxu0 0.0
    %1287 = vmatpush2.msra.mxu0 0.0
    %1288 = vmatprep.subr.mxu0 0.0
    %1289 = vmatpush2.msra.mxu0 0.0
    %1290 = vmatprep.subr.mxu0 0.0
    %1291 = vmatpush2.msra.mxu0 0.0
    %1292 = vmatprep.subr.mxu0 0.0
    %1293 = vmatpush2.msra.mxu0 0.0
    %1294 = vmatprep.mubr.f32.mxu0 0.0
    %1295 = vmatmul.mubr.f32.gmra.mxu0 %v1228
    %v1296 = vpop.f32.mrf.mxu0
    %v1297 = vadd.f32 %v1224, %v1296
    %v1298 = vpop.f32.mrf.mxu0
    %v1299 = vadd.f32 %v1224, %v1298
    %1300 = vdwg.mxu0
    %1301 = vmatprep.subr.mxu0 0.0
    %1302 = vmatpush1.msra.mxu0 0.0
    %1303 = vmatprep.subr.mxu0 0.0
    %1304 = vmatpush1.msra.mxu0 0.0
    %1305 = vmatprep.subr.mxu0 0.0
    %1306 = vmatpush1.msra.mxu0 0.0
    %1307 = vmatprep.subr.mxu0 0.0
    %1308 = vmatpush1.msra.mxu0 0.0
    %1309 = vmatprep.subr.mxu0 0.0
    %1310 = vmatpush1.msra.mxu0 0.0
    %1311 = vmatprep.subr.mxu0 0.0
    %1312 = vmatpush1.msra.mxu0 0.0
    %1313 = vmatprep.subr.mxu0 0.0
    %1314 = vmatpush1.msra.mxu0 0.0
    %1315 = vmatprep.subr.mxu0 0.0
    %1316 = vmatpush1.msra.mxu0 0.0
    %1317 = vmatprep.subr.mxu0 %v1220
    %1318 = vmatpush1.msra.mxu0 %v1219
    %1319 = vmatprep.subr.mxu0 %v1216
    %1320 = vmatpush1.msra.mxu0 %v1215
    %1321 = vmatprep.subr.mxu0 %v1212
    %1322 = vmatpush1.msra.mxu0 %v1211
    %1323 = vmatprep.subr.mxu0 %v1208
    %1324 = vmatpush1.msra.mxu0 %v1207
    %1325 = vmatprep.subr.mxu0 %v1204
    %1326 = vmatpush1.msra.mxu0 %v1203
    %1327 = vmatprep.subr.mxu0 %v1200
    %1328 = vmatpush1.msra.mxu0 %v1199
    %1329 = vmatprep.subr.mxu0 %v1196
    %1330 = vmatpush1.msra.mxu0 %v1195
    %1331 = vmatprep.subr.mxu0 %v1192
    %1332 = vmatpush1.msra.mxu0 %v1191
    %1333 = vmatprep.subr.mxu0 0.0
    %1334 = vmatpush2.msra.mxu0 0.0
    %1335 = vmatprep.subr.mxu0 0.0
    %1336 = vmatpush2.msra.mxu0 0.0
    %1337 = vmatprep.subr.mxu0 0.0
    %1338 = vmatpush2.msra.mxu0 0.0
    %1339 = vmatprep.subr.mxu0 0.0
    %1340 = vmatpush2.msra.mxu0 0.0
    %1341 = vmatprep.subr.mxu0 0.0
    %1342 = vmatpush2.msra.mxu0 0.0
    %1343 = vmatprep.subr.mxu0 0.0
    %1344 = vmatpush2.msra.mxu0 0.0
    %1345 = vmatprep.subr.mxu0 0.0
    %1346 = vmatpush2.msra.mxu0 0.0
    %1347 = vmatprep.subr.mxu0 0.0
    %1348 = vmatpush2.msra.mxu0 0.0
    %1349 = vmatprep.subr.mxu0 0.0
    %1350 = vmatpush2.msra.mxu0 0.0
    %1351 = vmatprep.subr.mxu0 0.0
    %1352 = vmatpush2.msra.mxu0 0.0
    %1353 = vmatprep.subr.mxu0 0.0
    %1354 = vmatpush2.msra.mxu0 0.0
    %1355 = vmatprep.subr.mxu0 0.0
    %1356 = vmatpush2.msra.mxu0 0.0
    %1357 = vmatprep.subr.mxu0 0.0
    %1358 = vmatpush2.msra.mxu0 0.0
    %1359 = vmatprep.subr.mxu0 0.0
    %1360 = vmatpush2.msra.mxu0 0.0
    %1361 = vmatprep.subr.mxu0 0.0
    %1362 = vmatpush2.msra.mxu0 0.0
    %1363 = vmatprep.subr.mxu0 0.0
    %1364 = vmatpush2.msra.mxu0 0.0
    %1365 = vmatprep.mubr.f32.mxu0 0.0
    %1366 = vmatmul.mubr.f32.gmra.mxu0 %v1228
    %v1367 = vpop.f32.mrf.mxu0
    %v1368 = vadd.f32 %v1224, %v1367
    %v1369 = vpop.f32.mrf.mxu0
    %v1370 = vadd.f32 %v1224, %v1369
    %1371 = vdwg.mxu0
    %1372 = vst [vmem:[#allocation7] sm:$0xff] %v1297
    %1373 = vst [vmem:[#allocation7 + $0x8] sm:$0xff] %v1299
    %1374 = vst [vmem:[#allocation7 + $0x10] sm:$0xff] %v1368
    %1375 = vst [vmem:[#allocation7 + $0x18] sm:$0xff] %v1370
    // Predicated region
    $region50: #{tpu_custom_call.1} parent=1 // pred_check
      _
    $region51: #{tpu_custom_call.1} parent=1 // pred_check_branch
      %1377 = sbr.rel (0) target = $region53
    $region52: #{tpu_custom_call.1} parent=1 // pred_region
      %s1379 = ssub.s32 512, 512
      %1380 = vsyncadd [#allocation4], %s1379
      %s1382 = sshll.u32 [#allocation7], 4
      %s1383 = int_to_ptr.vmem [resolvable:$true] %s1382
      %1385 = dma.vmem_to_hbm [thread:$0]  %s1383, 512, %s10, [#allocation4]
    $region53: #{tpu_custom_call.1} parent=1 // pred_fallthru
      _
    // Predicated region
    $region54: #{tpu_custom_call.1} parent=1 // pred_check
      _
    $region55: #{tpu_custom_call.1} parent=1 // pred_check_branch
      %1387 = sbr.rel (0) target = $region57
    $region56: #{tpu_custom_call.1} parent=1 // pred_region
      %1388 = dma.done [#allocation4], 512
    $region57: #{tpu_custom_call.1} parent=1 // pred_fallthru
      _
    %1389 = vsyncpa [#allocation3], 1
    %1390 = vsyncpa [#allocation6], 1
    %1391 = vsyncpa [#allocation4], 1

</llo_original>
